<compile_context>
chip_gen: v7x
topology: tpu7x:2x2x1
jax: 0.10.0
libtpu: 0.0.40
codegen_flags: <defaults>
</compile_context>

<pallas_src>
import jax
import jax.numpy as jnp
from jax.experimental import pallas as pl
from jax.experimental.pallas import tpu as pltpu

# --- model hyper-parameters (the `args` of the PyTorch module) ---------------
FEATS_IN = 2      # args.feats_in
FEATS_OUT = 2     # args.feats_out
HIDDEN = 32       # args.feats_hidden
OBS_LEN = 8       # args.obs_length
PRED_LEN = 8      # args.pred_length (== OBS_LEN so tra / tar_y shapes agree)
N_AGENTS = 8      # "batch" (second axis of the time-major tensor)

assert OBS_LEN == PRED_LEN, "tra / tar_y shapes only agree when obs == pred"


def _pack_rows(H, Fin):
    """Row offsets inside the packed parameter block (lane width = 8H)."""
    r_wgate = 0                          # rows [0, H)          : W_gate (H, 8H)
    r_whh = H                            # rows [H, 2H)         : [enc_whh | dec_whh]
    r_bgate = 2 * H                      # row  2H              : b_gate (1, 8H)
    r_p1b = 2 * H + 1                    # row  2H+1            : p1b (lanes 0:H)
    r_p1w = 2 * H + 2                    # rows [2H+2, 2H+2+Fin): p1w (lanes 0:H)
    r_p3b = 2 * H + 2 + Fin              # row                  : p3b (lanes 0:Fout)
    r_p3w = ((r_p3b + 1 + 7) // 8) * 8   # 8-aligned            : p3w (H, Fout)
    total = r_p3w + H
    return r_wgate, r_whh, r_bgate, r_p1b, r_p1w, r_p3b, r_p3w, total


def _seq2seq_kernel(x_ref, tar_ref, pk_ref, tra_ref, loss_ref):
    TN, Fin = x_ref.shape
    Fout = tra_ref.shape[1]
    H = pk_ref.shape[1] // 8             # pack width is 8H (two fused 4H gate blocks)
    G = 4 * H
    T = OBS_LEN
    N = TN // T
    r_wg, r_whh, r_bg, r_p1b, r_p1w, r_p3b, r_p3w, _ = _pack_rows(H, Fin)

    # --- pro1 (K = Fin = 2): VPU broadcast-FMAs, no MXU pass -------------------
    x = x_ref[...]                                               # (TN, Fin)
    h1 = pk_ref[r_p1b:r_p1b + 1, 0:H]                            # (1, H) bias
    for j in range(Fin):
        h1 = h1 + x[:, j:j + 1] * pk_ref[r_p1w + j:r_p1w + j + 1, 0:H]
    h1 = jnp.maximum(h1, 0.0)                                    # (TN, H)

    # --- fused pro2 + (encoder | decoder) input-to-gate matmuls ----------------
    # one (TN,H) x (H,8H) MXU pass; g-gate columns were pre-scaled by 2.
    gates_in = (jnp.dot(h1, pk_ref[r_wg:r_wg + H, :],
                        preferred_element_type=jnp.float32)
                + pk_ref[r_bg:r_bg + 1, :])                      # (TN, 8H)
    ge = gates_in[:, 0:G]                                        # encoder gates (TN, 4H)
    gd = gates_in[:, G:2 * G]                                    # decoder gates (TN, 4H)

    whh_e = pk_ref[r_whh:r_whh + H, 0:G]                         # (H, 4H)
    whh_d = pk_ref[r_whh:r_whh + H, G:2 * G]                     # (H, 4H)

    # single LSTM step; PyTorch gate order (i, f, g, o).  The g lanes already
    # hold 2*g, so ONE sigmoid pass gives i, f, o and tanh(g) = 2*sig(2g) - 1.
    def cell(gates, c_prev):
        s = jax.nn.sigmoid(gates)                                # one (N,4H) EUP pass
        i = s[:, 0:H]
        f = s[:, H:2 * H]
        g = 2.0 * s[:, 2 * H:3 * H] - 1.0                        # tanh(g)
        o = s[:, 3 * H:4 * H]
        c_new = f * c_prev + i * g
        h_new = o * jnp.tanh(c_new)                              # small (N,H) EUP pass
        return h_new, c_new

    # --- encoder recurrence (zero init); h/c stay in vregs, fully unrolled -----
    h = jnp.zeros((N, H), jnp.float32)
    c = jnp.zeros((N, H), jnp.float32)
    for t in range(T):
        gates = ge[t * N:(t + 1) * N, :] + jnp.dot(
            h, whh_e, preferred_element_type=jnp.float32)
        h, c = cell(gates, c)

    # --- decoder recurrence: init state = encoder final state, input = enc -----
    hs = []
    for t in range(T):
        gates = gd[t * N:(t + 1) * N, :] + jnp.dot(
            h, whh_d, preferred_element_type=jnp.float32)
        h, c = cell(gates, c)
        hs.append(h)
    h_all = jnp.concatenate(hs, axis=0)                          # (TN, H) in vregs

    # --- single batched pro3 projection + single 2D store ----------------------
    tra2d = (jnp.dot(h_all, pk_ref[r_p3w:r_p3w + H, 0:Fout],
                     preferred_element_type=jnp.float32)
             + pk_ref[r_p3b:r_p3b + 1, 0:Fout])                  # (TN, Fout)
    tra_ref[...] = tra2d

    # --- trajectory loss --------------------------------------------------------
    # TODO(synk): Traj_loss is not defined in the source file; implemented as
    # mean Euclidean displacement error between prediction and target.
    diff = tra2d - tar_ref[...]
    dist = jnp.sqrt(jnp.sum(diff * diff, axis=-1, keepdims=True))  # (TN, 1)
    loss_ref[0, 0] = jnp.sum(dist) / TN


def _pack_params(params):
    """Precompose / pre-scale weights and pack them into one VMEM block."""
    H, Fin, Fout = HIDDEN, FEATS_IN, FEATS_OUT
    r_wg, r_whh, r_bg, r_p1b, r_p1w, r_p3b, r_p3w, total = _pack_rows(H, Fin)

    wih_cat = jnp.concatenate([params["enc_wih"], params["dec_wih"]], axis=1)  # (H, 8H)
    whh_cat = jnp.concatenate([params["enc_whh"], params["dec_whh"]], axis=1)  # (H, 8H)
    b_cat = jnp.concatenate([params["enc_b"], params["dec_b"]], axis=1)        # (1, 8H)

    # fold pro2 into the input-to-gate matmul (exact: fusion is after the ReLU)
    w_gate = params["p2w"] @ wih_cat                                           # (H, 8H)
    b_gate = params["p2b"] @ wih_cat + b_cat                                   # (1, 8H)

    # pre-scale the g-gate (cell-candidate) columns by 2 so the kernel can use
    # a single sigmoid pass per step: tanh(g) = 2*sigmoid(2g) - 1
    blk = jnp.concatenate([jnp.ones((2 * H,), jnp.float32),
                           2.0 * jnp.ones((H,), jnp.float32),
                           jnp.ones((H,), jnp.float32)])
    gscale = jnp.concatenate([blk, blk])[None, :]                              # (1, 8H)
    w_gate = w_gate * gscale
    b_gate = b_gate * gscale
    whh_cat = whh_cat * gscale

    pack = jnp.zeros((total, 8 * H), jnp.float32)
    pack = pack.at[r_wg:r_wg + H, :].set(w_gate)
    pack = pack.at[r_whh:r_whh + H, :].set(whh_cat)
    pack = pack.at[r_bg:r_bg + 1, :].set(b_gate)
    pack = pack.at[r_p1b:r_p1b + 1, 0:H].set(params["p1b"])
    pack = pack.at[r_p1w:r_p1w + Fin, 0:H].set(params["p1w"])
    pack = pack.at[r_p3b:r_p3b + 1, 0:Fout].set(params["p3b"])
    pack = pack.at[r_p3w:r_p3w + H, 0:Fout].set(params["p3w"])
    return pack


def seq2seq_forward(inputs0, params):
    """inputs0: (T_total, N, F_total) time-major tensor (== PyTorch inputs[0])."""
    batch_in = inputs0[:OBS_LEN, :, :FEATS_IN]            # (obs, N, feats_in)
    tar_y = inputs0[OBS_LEN:, :, :FEATS_OUT]              # (pred, N, feats_out)
    T, N, _ = batch_in.shape

    # layout plumbing stays in the wrapper (free XLA work): the kernel sees 2D tiles
    x2d = batch_in.reshape(T * N, FEATS_IN)
    tar2d = tar_y.reshape(T * N, FEATS_OUT)
    pack = _pack_params(params)

    vmem = lambda: pl.BlockSpec(memory_space=pltpu.MemorySpace.VMEM)
    smem = lambda: pl.BlockSpec(memory_space=pltpu.MemorySpace.SMEM)

    tra2d, loss = pl.pallas_call(
        _seq2seq_kernel,
        out_shape=(jax.ShapeDtypeStruct((T * N, FEATS_OUT), jnp.float32),
                   jax.ShapeDtypeStruct((1, 1), jnp.float32)),
        in_specs=[vmem(), vmem(), vmem()],
        out_specs=(vmem(), smem()),
    )(x2d, tar2d, pack)

    tra = tra2d.reshape(T, N, FEATS_OUT)
    return tra, loss


def init_params(key):
    """Deterministic synthetic weights; PyTorch (4H, in) matrices stored transposed."""
    H = HIDDEN
    ks = jax.random.split(key, 12)

    def u(k, shape, fan_in):
        s = 1.0 / (fan_in ** 0.5)
        return jax.random.uniform(k, shape, jnp.float32, -s, s)

    return {
        # pro1 / pro2 / pro3
        "p1w": u(ks[0], (FEATS_IN, H), FEATS_IN),
        "p1b": u(ks[1], (1, H), FEATS_IN),
        "p2w": u(ks[2], (H, H), H),
        "p2b": u(ks[3], (1, H), H),
        "p3w": u(ks[4], (H, FEATS_OUT), H),
        "p3b": u(ks[5], (1, FEATS_OUT), H),
        # encoder LSTM (input size == H); bias = b_ih + b_hh folded together
        "enc_wih": u(ks[6], (H, 4 * H), H),
        "enc_whh": u(ks[7], (H, 4 * H), H),
        "enc_b":   u(ks[8], (1, 4 * H), H),
        # decoder LSTM
        "dec_wih": u(ks[9], (H, 4 * H), H),
        "dec_whh": u(ks[10], (H, 4 * H), H),
        "dec_b":   u(ks[11], (1, 4 * H), H),
    }


if __name__ == "__main__":
    key = jax.random.PRNGKey(0)
    kx, kp = jax.random.split(key)

    T_total = OBS_LEN + PRED_LEN            # 16
    F_total = 4                             # raw feature dim (>= feats_in)
    inputs0 = jax.random.normal(kx, (T_total, N_AGENTS, F_total), jnp.float32)
    params = init_params(kp)

    tra, loss = jax.jit(seq2seq_forward)(inputs0, params)
    jax.block_until_ready((tra, loss))
    assert tra.shape == (OBS_LEN, N_AGENTS, FEATS_OUT)
    assert loss.shape == (1, 1)
    assert bool(jnp.isfinite(tra).all()) and bool(jnp.isfinite(loss).all())
    print("KERNEL_OK")
</pallas_src>

<mosaic_0001>
module attributes {stable_mosaic.version = 11 : i64} {
  func.func @_seq2seq_kernel(%arg0: memref<64x2xf32, #tpu.memory_space<vmem>>, %arg1: memref<64x2xf32, #tpu.memory_space<vmem>>, %arg2: memref<104x256xf32, #tpu.memory_space<vmem>>, %arg3: memref<64x2xf32, #tpu.memory_space<vmem>>, %arg4: memref<1x1xf32, #tpu.memory_space<smem>>) attributes {dimension_semantics = [], scalar_prefetch = 0 : i64, scratch_operands = 0 : i64, tpu.core_type = #tpu.core_type<tc>} {
    %c0 = arith.constant 0 : index
    %c0_0 = arith.constant 0 : index
    %0 = vector.load %arg0[%c0, %c0_0] : memref<64x2xf32, #tpu.memory_space<vmem>>, vector<64x2xf32>
    %c65 = arith.constant 65 : index
    %c0_1 = arith.constant 0 : index
    %1 = vector.load %arg2[%c65, %c0_1] : memref<104x256xf32, #tpu.memory_space<vmem>>, vector<1x32xf32>
    %2 = vector.extract_strided_slice %0 {offsets = [0, 0], sizes = [64, 1], strides = [1, 1]} : vector<64x2xf32> to vector<64x1xf32>
    %c66 = arith.constant 66 : index
    %c0_2 = arith.constant 0 : index
    %3 = vector.load %arg2[%c66, %c0_2] : memref<104x256xf32, #tpu.memory_space<vmem>>, vector<1x32xf32>
    %4 = vector.broadcast %2 : vector<64x1xf32> to vector<64x32xf32>
    %5 = vector.broadcast %3 : vector<1x32xf32> to vector<64x32xf32>
    %6 = arith.mulf %4, %5 : vector<64x32xf32>
    %7 = vector.broadcast %1 : vector<1x32xf32> to vector<64x32xf32>
    %8 = arith.addf %7, %6 : vector<64x32xf32>
    %9 = vector.extract_strided_slice %0 {offsets = [0, 1], sizes = [64, 1], strides = [1, 1]} : vector<64x2xf32> to vector<64x1xf32>
    %c67 = arith.constant 67 : index
    %c0_3 = arith.constant 0 : index
    %10 = vector.load %arg2[%c67, %c0_3] : memref<104x256xf32, #tpu.memory_space<vmem>>, vector<1x32xf32>
    %11 = vector.broadcast %9 : vector<64x1xf32> to vector<64x32xf32>
    %12 = vector.broadcast %10 : vector<1x32xf32> to vector<64x32xf32>
    %13 = arith.mulf %11, %12 : vector<64x32xf32>
    %14 = arith.addf %8, %13 : vector<64x32xf32>
    %cst = arith.constant 0.000000e+00 : f32
    %15 = vector.broadcast %cst : f32 to vector<64x32xf32>
    %16 = arith.maximumf %14, %15 : vector<64x32xf32>
    %c0_4 = arith.constant 0 : index
    %c0_5 = arith.constant 0 : index
    %17 = vector.load %arg2[%c0_4, %c0_5] : memref<104x256xf32, #tpu.memory_space<vmem>>, vector<32x256xf32>
    %cst_6 = arith.constant dense<0.000000e+00> : vector<64x256xf32>
    %18 = tpu.matmul %16, %17, %cst_6 {dimension_numbers = #tpu.dot_dimension_numbers<[1], [0], [0], [1], [0, 0, 1, 1], [], []>} : vector<64x32xf32>, vector<32x256xf32>, vector<64x256xf32> -> vector<64x256xf32>
    %c64 = arith.constant 64 : index
    %c0_7 = arith.constant 0 : index
    %19 = vector.load %arg2[%c64, %c0_7] : memref<104x256xf32, #tpu.memory_space<vmem>>, vector<1x256xf32>
    %20 = vector.broadcast %19 : vector<1x256xf32> to vector<64x256xf32>
    %21 = arith.addf %18, %20 : vector<64x256xf32>
    %22 = vector.extract_strided_slice %21 {offsets = [0, 0], sizes = [64, 128], strides = [1, 1]} : vector<64x256xf32> to vector<64x128xf32>
    %23 = vector.extract_strided_slice %21 {offsets = [0, 128], sizes = [64, 128], strides = [1, 1]} : vector<64x256xf32> to vector<64x128xf32>
    %c32 = arith.constant 32 : index
    %c0_8 = arith.constant 0 : index
    %24 = vector.load %arg2[%c32, %c0_8] : memref<104x256xf32, #tpu.memory_space<vmem>>, vector<32x128xf32>
    %c32_9 = arith.constant 32 : index
    %c128 = arith.constant 128 : index
    %25 = vector.load %arg2[%c32_9, %c128] : memref<104x256xf32, #tpu.memory_space<vmem>>, vector<32x128xf32>
    %cst_10 = arith.constant 0.000000e+00 : f32
    %26 = vector.broadcast %cst_10 : f32 to vector<8x32xf32>
    %cst_11 = arith.constant 0.000000e+00 : f32
    %27 = vector.broadcast %cst_11 : f32 to vector<8x32xf32>
    %28 = vector.extract_strided_slice %22 {offsets = [0, 0], sizes = [8, 128], strides = [1, 1]} : vector<64x128xf32> to vector<8x128xf32>
    %cst_12 = arith.constant dense<0.000000e+00> : vector<8x128xf32>
    %29 = tpu.matmul %26, %24, %cst_12 {dimension_numbers = #tpu.dot_dimension_numbers<[1], [0], [0], [1], [0, 0, 1, 1], [], []>} : vector<8x32xf32>, vector<32x128xf32>, vector<8x128xf32> -> vector<8x128xf32>
    %30 = arith.addf %28, %29 : vector<8x128xf32>
    %31 = arith.negf %30 : vector<8x128xf32>
    %32 = math.exp %31 : vector<8x128xf32>
    %cst_13 = arith.constant 1.000000e+00 : f32
    %33 = vector.broadcast %cst_13 : f32 to vector<8x128xf32>
    %34 = arith.addf %33, %32 : vector<8x128xf32>
    %35 = arith.divf %33, %34 : vector<8x128xf32>
    %36 = vector.extract_strided_slice %35 {offsets = [0, 0], sizes = [8, 32], strides = [1, 1]} : vector<8x128xf32> to vector<8x32xf32>
    %37 = vector.extract_strided_slice %35 {offsets = [0, 32], sizes = [8, 32], strides = [1, 1]} : vector<8x128xf32> to vector<8x32xf32>
    %38 = vector.extract_strided_slice %35 {offsets = [0, 64], sizes = [8, 32], strides = [1, 1]} : vector<8x128xf32> to vector<8x32xf32>
    %cst_14 = arith.constant 2.000000e+00 : f32
    %39 = vector.broadcast %cst_14 : f32 to vector<8x32xf32>
    %40 = arith.mulf %39, %38 : vector<8x32xf32>
    %cst_15 = arith.constant 1.000000e+00 : f32
    %41 = vector.broadcast %cst_15 : f32 to vector<8x32xf32>
    %42 = arith.subf %40, %41 : vector<8x32xf32>
    %43 = vector.extract_strided_slice %35 {offsets = [0, 96], sizes = [8, 32], strides = [1, 1]} : vector<8x128xf32> to vector<8x32xf32>
    %44 = arith.mulf %37, %27 : vector<8x32xf32>
    %45 = arith.mulf %36, %42 : vector<8x32xf32>
    %46 = arith.addf %44, %45 : vector<8x32xf32>
    %47 = math.tanh %46 : vector<8x32xf32>
    %48 = arith.mulf %43, %47 : vector<8x32xf32>
    %49 = vector.extract_strided_slice %22 {offsets = [8, 0], sizes = [8, 128], strides = [1, 1]} : vector<64x128xf32> to vector<8x128xf32>
    %cst_16 = arith.constant dense<0.000000e+00> : vector<8x128xf32>
    %50 = tpu.matmul %48, %24, %cst_16 {dimension_numbers = #tpu.dot_dimension_numbers<[1], [0], [0], [1], [0, 0, 1, 1], [], []>} : vector<8x32xf32>, vector<32x128xf32>, vector<8x128xf32> -> vector<8x128xf32>
    %51 = arith.addf %49, %50 : vector<8x128xf32>
    %52 = arith.negf %51 : vector<8x128xf32>
    %53 = math.exp %52 : vector<8x128xf32>
    %cst_17 = arith.constant 1.000000e+00 : f32
    %54 = vector.broadcast %cst_17 : f32 to vector<8x128xf32>
    %55 = arith.addf %54, %53 : vector<8x128xf32>
    %56 = arith.divf %54, %55 : vector<8x128xf32>
    %57 = vector.extract_strided_slice %56 {offsets = [0, 0], sizes = [8, 32], strides = [1, 1]} : vector<8x128xf32> to vector<8x32xf32>
    %58 = vector.extract_strided_slice %56 {offsets = [0, 32], sizes = [8, 32], strides = [1, 1]} : vector<8x128xf32> to vector<8x32xf32>
    %59 = vector.extract_strided_slice %56 {offsets = [0, 64], sizes = [8, 32], strides = [1, 1]} : vector<8x128xf32> to vector<8x32xf32>
    %cst_18 = arith.constant 2.000000e+00 : f32
    %60 = vector.broadcast %cst_18 : f32 to vector<8x32xf32>
    %61 = arith.mulf %60, %59 : vector<8x32xf32>
    %cst_19 = arith.constant 1.000000e+00 : f32
    %62 = vector.broadcast %cst_19 : f32 to vector<8x32xf32>
    %63 = arith.subf %61, %62 : vector<8x32xf32>
    %64 = vector.extract_strided_slice %56 {offsets = [0, 96], sizes = [8, 32], strides = [1, 1]} : vector<8x128xf32> to vector<8x32xf32>
    %65 = arith.mulf %58, %46 : vector<8x32xf32>
    %66 = arith.mulf %57, %63 : vector<8x32xf32>
    %67 = arith.addf %65, %66 : vector<8x32xf32>
    %68 = math.tanh %67 : vector<8x32xf32>
    %69 = arith.mulf %64, %68 : vector<8x32xf32>
    %70 = vector.extract_strided_slice %22 {offsets = [16, 0], sizes = [8, 128], strides = [1, 1]} : vector<64x128xf32> to vector<8x128xf32>
    %cst_20 = arith.constant dense<0.000000e+00> : vector<8x128xf32>
    %71 = tpu.matmul %69, %24, %cst_20 {dimension_numbers = #tpu.dot_dimension_numbers<[1], [0], [0], [1], [0, 0, 1, 1], [], []>} : vector<8x32xf32>, vector<32x128xf32>, vector<8x128xf32> -> vector<8x128xf32>
    %72 = arith.addf %70, %71 : vector<8x128xf32>
    %73 = arith.negf %72 : vector<8x128xf32>
    %74 = math.exp %73 : vector<8x128xf32>
    %cst_21 = arith.constant 1.000000e+00 : f32
    %75 = vector.broadcast %cst_21 : f32 to vector<8x128xf32>
    %76 = arith.addf %75, %74 : vector<8x128xf32>
    %77 = arith.divf %75, %76 : vector<8x128xf32>
    %78 = vector.extract_strided_slice %77 {offsets = [0, 0], sizes = [8, 32], strides = [1, 1]} : vector<8x128xf32> to vector<8x32xf32>
    %79 = vector.extract_strided_slice %77 {offsets = [0, 32], sizes = [8, 32], strides = [1, 1]} : vector<8x128xf32> to vector<8x32xf32>
    %80 = vector.extract_strided_slice %77 {offsets = [0, 64], sizes = [8, 32], strides = [1, 1]} : vector<8x128xf32> to vector<8x32xf32>
    %cst_22 = arith.constant 2.000000e+00 : f32
    %81 = vector.broadcast %cst_22 : f32 to vector<8x32xf32>
    %82 = arith.mulf %81, %80 : vector<8x32xf32>
    %cst_23 = arith.constant 1.000000e+00 : f32
    %83 = vector.broadcast %cst_23 : f32 to vector<8x32xf32>
    %84 = arith.subf %82, %83 : vector<8x32xf32>
    %85 = vector.extract_strided_slice %77 {offsets = [0, 96], sizes = [8, 32], strides = [1, 1]} : vector<8x128xf32> to vector<8x32xf32>
    %86 = arith.mulf %79, %67 : vector<8x32xf32>
    %87 = arith.mulf %78, %84 : vector<8x32xf32>
    %88 = arith.addf %86, %87 : vector<8x32xf32>
    %89 = math.tanh %88 : vector<8x32xf32>
    %90 = arith.mulf %85, %89 : vector<8x32xf32>
    %91 = vector.extract_strided_slice %22 {offsets = [24, 0], sizes = [8, 128], strides = [1, 1]} : vector<64x128xf32> to vector<8x128xf32>
    %cst_24 = arith.constant dense<0.000000e+00> : vector<8x128xf32>
    %92 = tpu.matmul %90, %24, %cst_24 {dimension_numbers = #tpu.dot_dimension_numbers<[1], [0], [0], [1], [0, 0, 1, 1], [], []>} : vector<8x32xf32>, vector<32x128xf32>, vector<8x128xf32> -> vector<8x128xf32>
    %93 = arith.addf %91, %92 : vector<8x128xf32>
    %94 = arith.negf %93 : vector<8x128xf32>
    %95 = math.exp %94 : vector<8x128xf32>
    %cst_25 = arith.constant 1.000000e+00 : f32
    %96 = vector.broadcast %cst_25 : f32 to vector<8x128xf32>
    %97 = arith.addf %96, %95 : vector<8x128xf32>
    %98 = arith.divf %96, %97 : vector<8x128xf32>
    %99 = vector.extract_strided_slice %98 {offsets = [0, 0], sizes = [8, 32], strides = [1, 1]} : vector<8x128xf32> to vector<8x32xf32>
    %100 = vector.extract_strided_slice %98 {offsets = [0, 32], sizes = [8, 32], strides = [1, 1]} : vector<8x128xf32> to vector<8x32xf32>
    %101 = vector.extract_strided_slice %98 {offsets = [0, 64], sizes = [8, 32], strides = [1, 1]} : vector<8x128xf32> to vector<8x32xf32>
    %cst_26 = arith.constant 2.000000e+00 : f32
    %102 = vector.broadcast %cst_26 : f32 to vector<8x32xf32>
    %103 = arith.mulf %102, %101 : vector<8x32xf32>
    %cst_27 = arith.constant 1.000000e+00 : f32
    %104 = vector.broadcast %cst_27 : f32 to vector<8x32xf32>
    %105 = arith.subf %103, %104 : vector<8x32xf32>
    %106 = vector.extract_strided_slice %98 {offsets = [0, 96], sizes = [8, 32], strides = [1, 1]} : vector<8x128xf32> to vector<8x32xf32>
    %107 = arith.mulf %100, %88 : vector<8x32xf32>
    %108 = arith.mulf %99, %105 : vector<8x32xf32>
    %109 = arith.addf %107, %108 : vector<8x32xf32>
    %110 = math.tanh %109 : vector<8x32xf32>
    %111 = arith.mulf %106, %110 : vector<8x32xf32>
    %112 = vector.extract_strided_slice %22 {offsets = [32, 0], sizes = [8, 128], strides = [1, 1]} : vector<64x128xf32> to vector<8x128xf32>
    %cst_28 = arith.constant dense<0.000000e+00> : vector<8x128xf32>
    %113 = tpu.matmul %111, %24, %cst_28 {dimension_numbers = #tpu.dot_dimension_numbers<[1], [0], [0], [1], [0, 0, 1, 1], [], []>} : vector<8x32xf32>, vector<32x128xf32>, vector<8x128xf32> -> vector<8x128xf32>
    %114 = arith.addf %112, %113 : vector<8x128xf32>
    %115 = arith.negf %114 : vector<8x128xf32>
    %116 = math.exp %115 : vector<8x128xf32>
    %cst_29 = arith.constant 1.000000e+00 : f32
    %117 = vector.broadcast %cst_29 : f32 to vector<8x128xf32>
    %118 = arith.addf %117, %116 : vector<8x128xf32>
    %119 = arith.divf %117, %118 : vector<8x128xf32>
    %120 = vector.extract_strided_slice %119 {offsets = [0, 0], sizes = [8, 32], strides = [1, 1]} : vector<8x128xf32> to vector<8x32xf32>
    %121 = vector.extract_strided_slice %119 {offsets = [0, 32], sizes = [8, 32], strides = [1, 1]} : vector<8x128xf32> to vector<8x32xf32>
    %122 = vector.extract_strided_slice %119 {offsets = [0, 64], sizes = [8, 32], strides = [1, 1]} : vector<8x128xf32> to vector<8x32xf32>
    %cst_30 = arith.constant 2.000000e+00 : f32
    %123 = vector.broadcast %cst_30 : f32 to vector<8x32xf32>
    %124 = arith.mulf %123, %122 : vector<8x32xf32>
    %cst_31 = arith.constant 1.000000e+00 : f32
    %125 = vector.broadcast %cst_31 : f32 to vector<8x32xf32>
    %126 = arith.subf %124, %125 : vector<8x32xf32>
    %127 = vector.extract_strided_slice %119 {offsets = [0, 96], sizes = [8, 32], strides = [1, 1]} : vector<8x128xf32> to vector<8x32xf32>
    %128 = arith.mulf %121, %109 : vector<8x32xf32>
    %129 = arith.mulf %120, %126 : vector<8x32xf32>
    %130 = arith.addf %128, %129 : vector<8x32xf32>
    %131 = math.tanh %130 : vector<8x32xf32>
    %132 = arith.mulf %127, %131 : vector<8x32xf32>
    %133 = vector.extract_strided_slice %22 {offsets = [40, 0], sizes = [8, 128], strides = [1, 1]} : vector<64x128xf32> to vector<8x128xf32>
    %cst_32 = arith.constant dense<0.000000e+00> : vector<8x128xf32>
    %134 = tpu.matmul %132, %24, %cst_32 {dimension_numbers = #tpu.dot_dimension_numbers<[1], [0], [0], [1], [0, 0, 1, 1], [], []>} : vector<8x32xf32>, vector<32x128xf32>, vector<8x128xf32> -> vector<8x128xf32>
    %135 = arith.addf %133, %134 : vector<8x128xf32>
    %136 = arith.negf %135 : vector<8x128xf32>
    %137 = math.exp %136 : vector<8x128xf32>
    %cst_33 = arith.constant 1.000000e+00 : f32
    %138 = vector.broadcast %cst_33 : f32 to vector<8x128xf32>
    %139 = arith.addf %138, %137 : vector<8x128xf32>
    %140 = arith.divf %138, %139 : vector<8x128xf32>
    %141 = vector.extract_strided_slice %140 {offsets = [0, 0], sizes = [8, 32], strides = [1, 1]} : vector<8x128xf32> to vector<8x32xf32>
    %142 = vector.extract_strided_slice %140 {offsets = [0, 32], sizes = [8, 32], strides = [1, 1]} : vector<8x128xf32> to vector<8x32xf32>
    %143 = vector.extract_strided_slice %140 {offsets = [0, 64], sizes = [8, 32], strides = [1, 1]} : vector<8x128xf32> to vector<8x32xf32>
    %cst_34 = arith.constant 2.000000e+00 : f32
    %144 = vector.broadcast %cst_34 : f32 to vector<8x32xf32>
    %145 = arith.mulf %144, %143 : vector<8x32xf32>
    %cst_35 = arith.constant 1.000000e+00 : f32
    %146 = vector.broadcast %cst_35 : f32 to vector<8x32xf32>
    %147 = arith.subf %145, %146 : vector<8x32xf32>
    %148 = vector.extract_strided_slice %140 {offsets = [0, 96], sizes = [8, 32], strides = [1, 1]} : vector<8x128xf32> to vector<8x32xf32>
    %149 = arith.mulf %142, %130 : vector<8x32xf32>
    %150 = arith.mulf %141, %147 : vector<8x32xf32>
    %151 = arith.addf %149, %150 : vector<8x32xf32>
    %152 = math.tanh %151 : vector<8x32xf32>
    %153 = arith.mulf %148, %152 : vector<8x32xf32>
    %154 = vector.extract_strided_slice %22 {offsets = [48, 0], sizes = [8, 128], strides = [1, 1]} : vector<64x128xf32> to vector<8x128xf32>
    %cst_36 = arith.constant dense<0.000000e+00> : vector<8x128xf32>
    %155 = tpu.matmul %153, %24, %cst_36 {dimension_numbers = #tpu.dot_dimension_numbers<[1], [0], [0], [1], [0, 0, 1, 1], [], []>} : vector<8x32xf32>, vector<32x128xf32>, vector<8x128xf32> -> vector<8x128xf32>
    %156 = arith.addf %154, %155 : vector<8x128xf32>
    %157 = arith.negf %156 : vector<8x128xf32>
    %158 = math.exp %157 : vector<8x128xf32>
    %cst_37 = arith.constant 1.000000e+00 : f32
    %159 = vector.broadcast %cst_37 : f32 to vector<8x128xf32>
    %160 = arith.addf %159, %158 : vector<8x128xf32>
    %161 = arith.divf %159, %160 : vector<8x128xf32>
    %162 = vector.extract_strided_slice %161 {offsets = [0, 0], sizes = [8, 32], strides = [1, 1]} : vector<8x128xf32> to vector<8x32xf32>
    %163 = vector.extract_strided_slice %161 {offsets = [0, 32], sizes = [8, 32], strides = [1, 1]} : vector<8x128xf32> to vector<8x32xf32>
    %164 = vector.extract_strided_slice %161 {offsets = [0, 64], sizes = [8, 32], strides = [1, 1]} : vector<8x128xf32> to vector<8x32xf32>
    %cst_38 = arith.constant 2.000000e+00 : f32
    %165 = vector.broadcast %cst_38 : f32 to vector<8x32xf32>
    %166 = arith.mulf %165, %164 : vector<8x32xf32>
    %cst_39 = arith.constant 1.000000e+00 : f32
    %167 = vector.broadcast %cst_39 : f32 to vector<8x32xf32>
    %168 = arith.subf %166, %167 : vector<8x32xf32>
    %169 = vector.extract_strided_slice %161 {offsets = [0, 96], sizes = [8, 32], strides = [1, 1]} : vector<8x128xf32> to vector<8x32xf32>
    %170 = arith.mulf %163, %151 : vector<8x32xf32>
    %171 = arith.mulf %162, %168 : vector<8x32xf32>
    %172 = arith.addf %170, %171 : vector<8x32xf32>
    %173 = math.tanh %172 : vector<8x32xf32>
    %174 = arith.mulf %169, %173 : vector<8x32xf32>
    %175 = vector.extract_strided_slice %22 {offsets = [56, 0], sizes = [8, 128], strides = [1, 1]} : vector<64x128xf32> to vector<8x128xf32>
    %cst_40 = arith.constant dense<0.000000e+00> : vector<8x128xf32>
    %176 = tpu.matmul %174, %24, %cst_40 {dimension_numbers = #tpu.dot_dimension_numbers<[1], [0], [0], [1], [0, 0, 1, 1], [], []>} : vector<8x32xf32>, vector<32x128xf32>, vector<8x128xf32> -> vector<8x128xf32>
    %177 = arith.addf %175, %176 : vector<8x128xf32>
    %178 = arith.negf %177 : vector<8x128xf32>
    %179 = math.exp %178 : vector<8x128xf32>
    %cst_41 = arith.constant 1.000000e+00 : f32
    %180 = vector.broadcast %cst_41 : f32 to vector<8x128xf32>
    %181 = arith.addf %180, %179 : vector<8x128xf32>
    %182 = arith.divf %180, %181 : vector<8x128xf32>
    %183 = vector.extract_strided_slice %182 {offsets = [0, 0], sizes = [8, 32], strides = [1, 1]} : vector<8x128xf32> to vector<8x32xf32>
    %184 = vector.extract_strided_slice %182 {offsets = [0, 32], sizes = [8, 32], strides = [1, 1]} : vector<8x128xf32> to vector<8x32xf32>
    %185 = vector.extract_strided_slice %182 {offsets = [0, 64], sizes = [8, 32], strides = [1, 1]} : vector<8x128xf32> to vector<8x32xf32>
    %cst_42 = arith.constant 2.000000e+00 : f32
    %186 = vector.broadcast %cst_42 : f32 to vector<8x32xf32>
    %187 = arith.mulf %186, %185 : vector<8x32xf32>
    %cst_43 = arith.constant 1.000000e+00 : f32
    %188 = vector.broadcast %cst_43 : f32 to vector<8x32xf32>
    %189 = arith.subf %187, %188 : vector<8x32xf32>
    %190 = vector.extract_strided_slice %182 {offsets = [0, 96], sizes = [8, 32], strides = [1, 1]} : vector<8x128xf32> to vector<8x32xf32>
    %191 = arith.mulf %184, %172 : vector<8x32xf32>
    %192 = arith.mulf %183, %189 : vector<8x32xf32>
    %193 = arith.addf %191, %192 : vector<8x32xf32>
    %194 = math.tanh %193 : vector<8x32xf32>
    %195 = arith.mulf %190, %194 : vector<8x32xf32>
    %196 = vector.extract_strided_slice %23 {offsets = [0, 0], sizes = [8, 128], strides = [1, 1]} : vector<64x128xf32> to vector<8x128xf32>
    %cst_44 = arith.constant dense<0.000000e+00> : vector<8x128xf32>
    %197 = tpu.matmul %195, %25, %cst_44 {dimension_numbers = #tpu.dot_dimension_numbers<[1], [0], [0], [1], [0, 0, 1, 1], [], []>} : vector<8x32xf32>, vector<32x128xf32>, vector<8x128xf32> -> vector<8x128xf32>
    %198 = arith.addf %196, %197 : vector<8x128xf32>
    %199 = arith.negf %198 : vector<8x128xf32>
    %200 = math.exp %199 : vector<8x128xf32>
    %cst_45 = arith.constant 1.000000e+00 : f32
    %201 = vector.broadcast %cst_45 : f32 to vector<8x128xf32>
    %202 = arith.addf %201, %200 : vector<8x128xf32>
    %203 = arith.divf %201, %202 : vector<8x128xf32>
    %204 = vector.extract_strided_slice %203 {offsets = [0, 0], sizes = [8, 32], strides = [1, 1]} : vector<8x128xf32> to vector<8x32xf32>
    %205 = vector.extract_strided_slice %203 {offsets = [0, 32], sizes = [8, 32], strides = [1, 1]} : vector<8x128xf32> to vector<8x32xf32>
    %206 = vector.extract_strided_slice %203 {offsets = [0, 64], sizes = [8, 32], strides = [1, 1]} : vector<8x128xf32> to vector<8x32xf32>
    %cst_46 = arith.constant 2.000000e+00 : f32
    %207 = vector.broadcast %cst_46 : f32 to vector<8x32xf32>
    %208 = arith.mulf %207, %206 : vector<8x32xf32>
    %cst_47 = arith.constant 1.000000e+00 : f32
    %209 = vector.broadcast %cst_47 : f32 to vector<8x32xf32>
    %210 = arith.subf %208, %209 : vector<8x32xf32>
    %211 = vector.extract_strided_slice %203 {offsets = [0, 96], sizes = [8, 32], strides = [1, 1]} : vector<8x128xf32> to vector<8x32xf32>
    %212 = arith.mulf %205, %193 : vector<8x32xf32>
    %213 = arith.mulf %204, %210 : vector<8x32xf32>
    %214 = arith.addf %212, %213 : vector<8x32xf32>
    %215 = math.tanh %214 : vector<8x32xf32>
    %216 = arith.mulf %211, %215 : vector<8x32xf32>
    %217 = vector.extract_strided_slice %23 {offsets = [8, 0], sizes = [8, 128], strides = [1, 1]} : vector<64x128xf32> to vector<8x128xf32>
    %cst_48 = arith.constant dense<0.000000e+00> : vector<8x128xf32>
    %218 = tpu.matmul %216, %25, %cst_48 {dimension_numbers = #tpu.dot_dimension_numbers<[1], [0], [0], [1], [0, 0, 1, 1], [], []>} : vector<8x32xf32>, vector<32x128xf32>, vector<8x128xf32> -> vector<8x128xf32>
    %219 = arith.addf %217, %218 : vector<8x128xf32>
    %220 = arith.negf %219 : vector<8x128xf32>
    %221 = math.exp %220 : vector<8x128xf32>
    %cst_49 = arith.constant 1.000000e+00 : f32
    %222 = vector.broadcast %cst_49 : f32 to vector<8x128xf32>
    %223 = arith.addf %222, %221 : vector<8x128xf32>
    %224 = arith.divf %222, %223 : vector<8x128xf32>
    %225 = vector.extract_strided_slice %224 {offsets = [0, 0], sizes = [8, 32], strides = [1, 1]} : vector<8x128xf32> to vector<8x32xf32>
    %226 = vector.extract_strided_slice %224 {offsets = [0, 32], sizes = [8, 32], strides = [1, 1]} : vector<8x128xf32> to vector<8x32xf32>
    %227 = vector.extract_strided_slice %224 {offsets = [0, 64], sizes = [8, 32], strides = [1, 1]} : vector<8x128xf32> to vector<8x32xf32>
    %cst_50 = arith.constant 2.000000e+00 : f32
    %228 = vector.broadcast %cst_50 : f32 to vector<8x32xf32>
    %229 = arith.mulf %228, %227 : vector<8x32xf32>
    %cst_51 = arith.constant 1.000000e+00 : f32
    %230 = vector.broadcast %cst_51 : f32 to vector<8x32xf32>
    %231 = arith.subf %229, %230 : vector<8x32xf32>
    %232 = vector.extract_strided_slice %224 {offsets = [0, 96], sizes = [8, 32], strides = [1, 1]} : vector<8x128xf32> to vector<8x32xf32>
    %233 = arith.mulf %226, %214 : vector<8x32xf32>
    %234 = arith.mulf %225, %231 : vector<8x32xf32>
    %235 = arith.addf %233, %234 : vector<8x32xf32>
    %236 = math.tanh %235 : vector<8x32xf32>
    %237 = arith.mulf %232, %236 : vector<8x32xf32>
    %238 = vector.extract_strided_slice %23 {offsets = [16, 0], sizes = [8, 128], strides = [1, 1]} : vector<64x128xf32> to vector<8x128xf32>
    %cst_52 = arith.constant dense<0.000000e+00> : vector<8x128xf32>
    %239 = tpu.matmul %237, %25, %cst_52 {dimension_numbers = #tpu.dot_dimension_numbers<[1], [0], [0], [1], [0, 0, 1, 1], [], []>} : vector<8x32xf32>, vector<32x128xf32>, vector<8x128xf32> -> vector<8x128xf32>
    %240 = arith.addf %238, %239 : vector<8x128xf32>
    %241 = arith.negf %240 : vector<8x128xf32>
    %242 = math.exp %241 : vector<8x128xf32>
    %cst_53 = arith.constant 1.000000e+00 : f32
    %243 = vector.broadcast %cst_53 : f32 to vector<8x128xf32>
    %244 = arith.addf %243, %242 : vector<8x128xf32>
    %245 = arith.divf %243, %244 : vector<8x128xf32>
    %246 = vector.extract_strided_slice %245 {offsets = [0, 0], sizes = [8, 32], strides = [1, 1]} : vector<8x128xf32> to vector<8x32xf32>
    %247 = vector.extract_strided_slice %245 {offsets = [0, 32], sizes = [8, 32], strides = [1, 1]} : vector<8x128xf32> to vector<8x32xf32>
    %248 = vector.extract_strided_slice %245 {offsets = [0, 64], sizes = [8, 32], strides = [1, 1]} : vector<8x128xf32> to vector<8x32xf32>
    %cst_54 = arith.constant 2.000000e+00 : f32
    %249 = vector.broadcast %cst_54 : f32 to vector<8x32xf32>
    %250 = arith.mulf %249, %248 : vector<8x32xf32>
    %cst_55 = arith.constant 1.000000e+00 : f32
    %251 = vector.broadcast %cst_55 : f32 to vector<8x32xf32>
    %252 = arith.subf %250, %251 : vector<8x32xf32>
    %253 = vector.extract_strided_slice %245 {offsets = [0, 96], sizes = [8, 32], strides = [1, 1]} : vector<8x128xf32> to vector<8x32xf32>
    %254 = arith.mulf %247, %235 : vector<8x32xf32>
    %255 = arith.mulf %246, %252 : vector<8x32xf32>
    %256 = arith.addf %254, %255 : vector<8x32xf32>
    %257 = math.tanh %256 : vector<8x32xf32>
    %258 = arith.mulf %253, %257 : vector<8x32xf32>
    %259 = vector.extract_strided_slice %23 {offsets = [24, 0], sizes = [8, 128], strides = [1, 1]} : vector<64x128xf32> to vector<8x128xf32>
    %cst_56 = arith.constant dense<0.000000e+00> : vector<8x128xf32>
    %260 = tpu.matmul %258, %25, %cst_56 {dimension_numbers = #tpu.dot_dimension_numbers<[1], [0], [0], [1], [0, 0, 1, 1], [], []>} : vector<8x32xf32>, vector<32x128xf32>, vector<8x128xf32> -> vector<8x128xf32>
    %261 = arith.addf %259, %260 : vector<8x128xf32>
    %262 = arith.negf %261 : vector<8x128xf32>
    %263 = math.exp %262 : vector<8x128xf32>
    %cst_57 = arith.constant 1.000000e+00 : f32
    %264 = vector.broadcast %cst_57 : f32 to vector<8x128xf32>
    %265 = arith.addf %264, %263 : vector<8x128xf32>
    %266 = arith.divf %264, %265 : vector<8x128xf32>
    %267 = vector.extract_strided_slice %266 {offsets = [0, 0], sizes = [8, 32], strides = [1, 1]} : vector<8x128xf32> to vector<8x32xf32>
    %268 = vector.extract_strided_slice %266 {offsets = [0, 32], sizes = [8, 32], strides = [1, 1]} : vector<8x128xf32> to vector<8x32xf32>
    %269 = vector.extract_strided_slice %266 {offsets = [0, 64], sizes = [8, 32], strides = [1, 1]} : vector<8x128xf32> to vector<8x32xf32>
    %cst_58 = arith.constant 2.000000e+00 : f32
    %270 = vector.broadcast %cst_58 : f32 to vector<8x32xf32>
    %271 = arith.mulf %270, %269 : vector<8x32xf32>
    %cst_59 = arith.constant 1.000000e+00 : f32
    %272 = vector.broadcast %cst_59 : f32 to vector<8x32xf32>
    %273 = arith.subf %271, %272 : vector<8x32xf32>
    %274 = vector.extract_strided_slice %266 {offsets = [0, 96], sizes = [8, 32], strides = [1, 1]} : vector<8x128xf32> to vector<8x32xf32>
    %275 = arith.mulf %268, %256 : vector<8x32xf32>
    %276 = arith.mulf %267, %273 : vector<8x32xf32>
    %277 = arith.addf %275, %276 : vector<8x32xf32>
    %278 = math.tanh %277 : vector<8x32xf32>
    %279 = arith.mulf %274, %278 : vector<8x32xf32>
    %280 = vector.extract_strided_slice %23 {offsets = [32, 0], sizes = [8, 128], strides = [1, 1]} : vector<64x128xf32> to vector<8x128xf32>
    %cst_60 = arith.constant dense<0.000000e+00> : vector<8x128xf32>
    %281 = tpu.matmul %279, %25, %cst_60 {dimension_numbers = #tpu.dot_dimension_numbers<[1], [0], [0], [1], [0, 0, 1, 1], [], []>} : vector<8x32xf32>, vector<32x128xf32>, vector<8x128xf32> -> vector<8x128xf32>
    %282 = arith.addf %280, %281 : vector<8x128xf32>
    %283 = arith.negf %282 : vector<8x128xf32>
    %284 = math.exp %283 : vector<8x128xf32>
    %cst_61 = arith.constant 1.000000e+00 : f32
    %285 = vector.broadcast %cst_61 : f32 to vector<8x128xf32>
    %286 = arith.addf %285, %284 : vector<8x128xf32>
    %287 = arith.divf %285, %286 : vector<8x128xf32>
    %288 = vector.extract_strided_slice %287 {offsets = [0, 0], sizes = [8, 32], strides = [1, 1]} : vector<8x128xf32> to vector<8x32xf32>
    %289 = vector.extract_strided_slice %287 {offsets = [0, 32], sizes = [8, 32], strides = [1, 1]} : vector<8x128xf32> to vector<8x32xf32>
    %290 = vector.extract_strided_slice %287 {offsets = [0, 64], sizes = [8, 32], strides = [1, 1]} : vector<8x128xf32> to vector<8x32xf32>
    %cst_62 = arith.constant 2.000000e+00 : f32
    %291 = vector.broadcast %cst_62 : f32 to vector<8x32xf32>
    %292 = arith.mulf %291, %290 : vector<8x32xf32>
    %cst_63 = arith.constant 1.000000e+00 : f32
    %293 = vector.broadcast %cst_63 : f32 to vector<8x32xf32>
    %294 = arith.subf %292, %293 : vector<8x32xf32>
    %295 = vector.extract_strided_slice %287 {offsets = [0, 96], sizes = [8, 32], strides = [1, 1]} : vector<8x128xf32> to vector<8x32xf32>
    %296 = arith.mulf %289, %277 : vector<8x32xf32>
    %297 = arith.mulf %288, %294 : vector<8x32xf32>
    %298 = arith.addf %296, %297 : vector<8x32xf32>
    %299 = math.tanh %298 : vector<8x32xf32>
    %300 = arith.mulf %295, %299 : vector<8x32xf32>
    %301 = vector.extract_strided_slice %23 {offsets = [40, 0], sizes = [8, 128], strides = [1, 1]} : vector<64x128xf32> to vector<8x128xf32>
    %cst_64 = arith.constant dense<0.000000e+00> : vector<8x128xf32>
    %302 = tpu.matmul %300, %25, %cst_64 {dimension_numbers = #tpu.dot_dimension_numbers<[1], [0], [0], [1], [0, 0, 1, 1], [], []>} : vector<8x32xf32>, vector<32x128xf32>, vector<8x128xf32> -> vector<8x128xf32>
    %303 = arith.addf %301, %302 : vector<8x128xf32>
    %304 = arith.negf %303 : vector<8x128xf32>
    %305 = math.exp %304 : vector<8x128xf32>
    %cst_65 = arith.constant 1.000000e+00 : f32
    %306 = vector.broadcast %cst_65 : f32 to vector<8x128xf32>
    %307 = arith.addf %306, %305 : vector<8x128xf32>
    %308 = arith.divf %306, %307 : vector<8x128xf32>
    %309 = vector.extract_strided_slice %308 {offsets = [0, 0], sizes = [8, 32], strides = [1, 1]} : vector<8x128xf32> to vector<8x32xf32>
    %310 = vector.extract_strided_slice %308 {offsets = [0, 32], sizes = [8, 32], strides = [1, 1]} : vector<8x128xf32> to vector<8x32xf32>
    %311 = vector.extract_strided_slice %308 {offsets = [0, 64], sizes = [8, 32], strides = [1, 1]} : vector<8x128xf32> to vector<8x32xf32>
    %cst_66 = arith.constant 2.000000e+00 : f32
    %312 = vector.broadcast %cst_66 : f32 to vector<8x32xf32>
    %313 = arith.mulf %312, %311 : vector<8x32xf32>
    %cst_67 = arith.constant 1.000000e+00 : f32
    %314 = vector.broadcast %cst_67 : f32 to vector<8x32xf32>
    %315 = arith.subf %313, %314 : vector<8x32xf32>
    %316 = vector.extract_strided_slice %308 {offsets = [0, 96], sizes = [8, 32], strides = [1, 1]} : vector<8x128xf32> to vector<8x32xf32>
    %317 = arith.mulf %310, %298 : vector<8x32xf32>
    %318 = arith.mulf %309, %315 : vector<8x32xf32>
    %319 = arith.addf %317, %318 : vector<8x32xf32>
    %320 = math.tanh %319 : vector<8x32xf32>
    %321 = arith.mulf %316, %320 : vector<8x32xf32>
    %322 = vector.extract_strided_slice %23 {offsets = [48, 0], sizes = [8, 128], strides = [1, 1]} : vector<64x128xf32> to vector<8x128xf32>
    %cst_68 = arith.constant dense<0.000000e+00> : vector<8x128xf32>
    %323 = tpu.matmul %321, %25, %cst_68 {dimension_numbers = #tpu.dot_dimension_numbers<[1], [0], [0], [1], [0, 0, 1, 1], [], []>} : vector<8x32xf32>, vector<32x128xf32>, vector<8x128xf32> -> vector<8x128xf32>
    %324 = arith.addf %322, %323 : vector<8x128xf32>
    %325 = arith.negf %324 : vector<8x128xf32>
    %326 = math.exp %325 : vector<8x128xf32>
    %cst_69 = arith.constant 1.000000e+00 : f32
    %327 = vector.broadcast %cst_69 : f32 to vector<8x128xf32>
    %328 = arith.addf %327, %326 : vector<8x128xf32>
    %329 = arith.divf %327, %328 : vector<8x128xf32>
    %330 = vector.extract_strided_slice %329 {offsets = [0, 0], sizes = [8, 32], strides = [1, 1]} : vector<8x128xf32> to vector<8x32xf32>
    %331 = vector.extract_strided_slice %329 {offsets = [0, 32], sizes = [8, 32], strides = [1, 1]} : vector<8x128xf32> to vector<8x32xf32>
    %332 = vector.extract_strided_slice %329 {offsets = [0, 64], sizes = [8, 32], strides = [1, 1]} : vector<8x128xf32> to vector<8x32xf32>
    %cst_70 = arith.constant 2.000000e+00 : f32
    %333 = vector.broadcast %cst_70 : f32 to vector<8x32xf32>
    %334 = arith.mulf %333, %332 : vector<8x32xf32>
    %cst_71 = arith.constant 1.000000e+00 : f32
    %335 = vector.broadcast %cst_71 : f32 to vector<8x32xf32>
    %336 = arith.subf %334, %335 : vector<8x32xf32>
    %337 = vector.extract_strided_slice %329 {offsets = [0, 96], sizes = [8, 32], strides = [1, 1]} : vector<8x128xf32> to vector<8x32xf32>
    %338 = arith.mulf %331, %319 : vector<8x32xf32>
    %339 = arith.mulf %330, %336 : vector<8x32xf32>
    %340 = arith.addf %338, %339 : vector<8x32xf32>
    %341 = math.tanh %340 : vector<8x32xf32>
    %342 = arith.mulf %337, %341 : vector<8x32xf32>
    %343 = vector.extract_strided_slice %23 {offsets = [56, 0], sizes = [8, 128], strides = [1, 1]} : vector<64x128xf32> to vector<8x128xf32>
    %cst_72 = arith.constant dense<0.000000e+00> : vector<8x128xf32>
    %344 = tpu.matmul %342, %25, %cst_72 {dimension_numbers = #tpu.dot_dimension_numbers<[1], [0], [0], [1], [0, 0, 1, 1], [], []>} : vector<8x32xf32>, vector<32x128xf32>, vector<8x128xf32> -> vector<8x128xf32>
    %345 = arith.addf %343, %344 : vector<8x128xf32>
    %346 = arith.negf %345 : vector<8x128xf32>
    %347 = math.exp %346 : vector<8x128xf32>
    %cst_73 = arith.constant 1.000000e+00 : f32
    %348 = vector.broadcast %cst_73 : f32 to vector<8x128xf32>
    %349 = arith.addf %348, %347 : vector<8x128xf32>
    %350 = arith.divf %348, %349 : vector<8x128xf32>
    %351 = vector.extract_strided_slice %350 {offsets = [0, 0], sizes = [8, 32], strides = [1, 1]} : vector<8x128xf32> to vector<8x32xf32>
    %352 = vector.extract_strided_slice %350 {offsets = [0, 32], sizes = [8, 32], strides = [1, 1]} : vector<8x128xf32> to vector<8x32xf32>
    %353 = vector.extract_strided_slice %350 {offsets = [0, 64], sizes = [8, 32], strides = [1, 1]} : vector<8x128xf32> to vector<8x32xf32>
    %cst_74 = arith.constant 2.000000e+00 : f32
    %354 = vector.broadcast %cst_74 : f32 to vector<8x32xf32>
    %355 = arith.mulf %354, %353 : vector<8x32xf32>
    %cst_75 = arith.constant 1.000000e+00 : f32
    %356 = vector.broadcast %cst_75 : f32 to vector<8x32xf32>
    %357 = arith.subf %355, %356 : vector<8x32xf32>
    %358 = vector.extract_strided_slice %350 {offsets = [0, 96], sizes = [8, 32], strides = [1, 1]} : vector<8x128xf32> to vector<8x32xf32>
    %359 = arith.mulf %352, %340 : vector<8x32xf32>
    %360 = arith.mulf %351, %357 : vector<8x32xf32>
    %361 = arith.addf %359, %360 : vector<8x32xf32>
    %362 = math.tanh %361 : vector<8x32xf32>
    %363 = arith.mulf %358, %362 : vector<8x32xf32>
    %364 = tpu.concatenate %216, %237, %258, %279, %300, %321, %342, %363 in 0 : vector<8x32xf32>, vector<8x32xf32>, vector<8x32xf32>, vector<8x32xf32>, vector<8x32xf32>, vector<8x32xf32>, vector<8x32xf32>, vector<8x32xf32> -> vector<64x32xf32>
    %c72 = arith.constant 72 : index
    %c0_76 = arith.constant 0 : index
    %365 = vector.load %arg2[%c72, %c0_76] : memref<104x256xf32, #tpu.memory_space<vmem>>, vector<32x2xf32>
    %cst_77 = arith.constant dense<0.000000e+00> : vector<64x2xf32>
    %366 = tpu.matmul %364, %365, %cst_77 {dimension_numbers = #tpu.dot_dimension_numbers<[1], [0], [0], [1], [0, 0, 1, 1], [], []>} : vector<64x32xf32>, vector<32x2xf32>, vector<64x2xf32> -> vector<64x2xf32>
    %c68 = arith.constant 68 : index
    %c0_78 = arith.constant 0 : index
    %367 = vector.load %arg2[%c68, %c0_78] : memref<104x256xf32, #tpu.memory_space<vmem>>, vector<1x2xf32>
    %368 = vector.broadcast %367 : vector<1x2xf32> to vector<64x2xf32>
    %369 = arith.addf %366, %368 : vector<64x2xf32>
    %c0_79 = arith.constant 0 : index
    %c0_80 = arith.constant 0 : index
    %370 = vector.load %arg3[%c0_79, %c0_80] : memref<64x2xf32, #tpu.memory_space<vmem>>, vector<64x2xf32>
    tpu.vector_store %arg3[%c0_79, %c0_80], %369 {strides = array<i32>} : memref<64x2xf32, #tpu.memory_space<vmem>>, vector<64x2xf32>,
    %c0_81 = arith.constant 0 : index
    %c0_82 = arith.constant 0 : index
    %371 = vector.load %arg1[%c0_81, %c0_82] : memref<64x2xf32, #tpu.memory_space<vmem>>, vector<64x2xf32>
    %372 = arith.subf %369, %371 : vector<64x2xf32>
    %373 = arith.mulf %372, %372 : vector<64x2xf32>
    %cst_83 = arith.constant dense<0.000000e+00> : vector<64xf32>
    %374 = vector.multi_reduction <add>, %373, %cst_83 [1] : vector<64x2xf32> to vector<64xf32>
    %375 = vector.shape_cast %374 : vector<64xf32> to vector<64x1xf32>
    %376 = math.sqrt %375 : vector<64x1xf32>
    %377 = vector.shape_cast %376 : vector<64x1xf32> to vector<1x64x1xf32>
    %cst_84 = arith.constant dense<0.000000e+00> : vector<1xf32>
    %378 = vector.multi_reduction <add>, %377, %cst_84 [1, 2] : vector<1x64x1xf32> to vector<1xf32>
    %379 = vector.shape_cast %378 : vector<1xf32> to vector<1x1x1xf32>
    %380 = vector.extract %379[0, 0, 0] : f32 from vector<1x1x1xf32>
    %cst_85 = arith.constant 6.400000e+01 : f32
    %381 = arith.divf %380, %cst_85 : f32
    %c0_86 = arith.constant 0 : index
    %c0_87 = arith.constant 0 : index
    %382 = memref.load %arg4[%c0_86, %c0_87] : memref<1x1xf32, #tpu.memory_space<smem>>
    memref.store %381, %arg4[%c0_86, %c0_87] : memref<1x1xf32, #tpu.memory_space<smem>>
    return
  }
}

</mosaic_0001>

<llo_original>
// kernel: seq2seq_forward.1
$region0: #{seq2seq_forward.1}
  #allocation0 [shape = 'u32[]', space=smem, size = 0x4, offset = 0x4, fixed_abs, tag = 'smem constant byte address 0x4 - core index']
  #allocation1 [shape = 'u32[144,128]{1,0:T(1,128)}', space=vmem, size = 0x12000, scoped, tag = 'internal scratch']
  %s0 = inlined_call_operand.vmem [shape: f32[64,2], index: 0, kind: input, shape index: {}]
  %s1 = inlined_call_operand.vmem [shape: f32[64,2], index: 1, kind: input, shape index: {}]
  %s2 = inlined_call_operand.vmem [shape: f32[104,256], index: 2, kind: input, shape index: {}]
  %s3 = inlined_call_operand.vmem [shape: f32[64,2], index: 3, kind: output, shape index: {0}]
  %s4 = inlined_call_operand.hbm [shape: f32[1,1], index: 4, kind: output, shape index: {1}]
  %5 = xla_tuple %s3, %s4
  %s6 = sld [smem:[#allocation0]]
  $region30: #{seq2seq_forward.1} parent=0
    _
  %s8 = ssub.s32 1, %s6
  %s9 = scalar_select 0, %s8, %s6
  $region1: #{seq2seq_forward.1} parent=0
    #allocation2 [shape = 'u8[512]{0}', space=smem, size = 0x200, scoped, tag = 'output window, operand 1, single buffered']
    #allocation3 [shape = 's32[1]{0}', space=sflag, size = 0x4, scoped, tag = 'scoped memory for seq2seq_forward.1']
    %10 = vsyncpa [#allocation3], 0
    // Predicated region
    $region2: #{seq2seq_forward.1} parent=1 // pred_check
      _
    $region3: #{seq2seq_forward.1} parent=1 // pred_check_branch
      %12 = sbr.rel (0) target = $region5
    $region4: #{seq2seq_forward.1} parent=1 // pred_region
      _
    $region5: #{seq2seq_forward.1} parent=1 // pred_fallthru
      _
    // Predicated region
    $region6: #{seq2seq_forward.1} parent=1 // pred_check
      _
    $region7: #{seq2seq_forward.1} parent=1 // pred_check_branch
      %14 = sbr.rel (0) target = $region9
    $region8: #{seq2seq_forward.1} parent=1 // pred_region
      _
    $region9: #{seq2seq_forward.1} parent=1 // pred_fallthru
      _
    // Predicated region
    $region10: #{seq2seq_forward.1} parent=1 // pred_check
      _
    $region11: #{seq2seq_forward.1} parent=1 // pred_check_branch
      %16 = sbr.rel (0) target = $region13
    $region12: #{seq2seq_forward.1} parent=1 // pred_region
      _
    $region13: #{seq2seq_forward.1} parent=1 // pred_fallthru
      _
    %v17 = vld [vmem:[%s0] sm:$0xff]
    %v18 = vld [vmem:[%s0 + $0x8] sm:$0xff]
    %v19 = vld [vmem:[%s0 + $0x10] sm:$0xff]
    %v20 = vld [vmem:[%s0 + $0x18] sm:$0xff]
    %v21 = vld [vmem:[%s0 + $0x20] sm:$0xff]
    %v22 = vld [vmem:[%s0 + $0x28] sm:$0xff]
    %v23 = vld [vmem:[%s0 + $0x30] sm:$0xff]
    %v24 = vld [vmem:[%s0 + $0x38] sm:$0xff]
    %v25 = vld [vmem:[%s2 + $0x81] ss:$0 sm:$0xff]
    %v26 = vld [vmem:[%s2 + $0x82] ss:$0 sm:$0xff]
    %28 = vset.pattern.permute.xlu0 0
    %29 = vperm.xlu0 %28, %v17
    %v30 = vpop.permute.xlu0 %29
    %33 = vset.pattern.permute.xlu0 0
    %34 = vperm.xlu0 %33, %v18
    %v35 = vpop.permute.xlu0 %34
    %38 = vset.pattern.permute.xlu0 0
    %39 = vperm.xlu0 %38, %v19
    %v40 = vpop.permute.xlu0 %39
    %43 = vset.pattern.permute.xlu0 0
    %44 = vperm.xlu0 %43, %v20
    %v45 = vpop.permute.xlu0 %44
    %48 = vset.pattern.permute.xlu0 0
    %49 = vperm.xlu0 %48, %v21
    %v50 = vpop.permute.xlu0 %49
    %53 = vset.pattern.permute.xlu0 0
    %54 = vperm.xlu0 %53, %v22
    %v55 = vpop.permute.xlu0 %54
    %58 = vset.pattern.permute.xlu0 0
    %59 = vperm.xlu0 %58, %v23
    %v60 = vpop.permute.xlu0 %59
    %63 = vset.pattern.permute.xlu0 0
    %64 = vperm.xlu0 %63, %v24
    %v65 = vpop.permute.xlu0 %64
    %v67 = vmul.f32 %v30, %v26
    %v68 = vmul.f32 %v35, %v26
    %v69 = vmul.f32 %v40, %v26
    %v70 = vmul.f32 %v45, %v26
    %v71 = vmul.f32 %v50, %v26
    %v72 = vmul.f32 %v55, %v26
    %v73 = vmul.f32 %v60, %v26
    %v74 = vmul.f32 %v65, %v26
    %v75 = vadd.f32 %v25, %v67
    %v76 = vadd.f32 %v25, %v68
    %v77 = vadd.f32 %v25, %v69
    %v78 = vadd.f32 %v25, %v70
    %v79 = vadd.f32 %v25, %v71
    %v80 = vadd.f32 %v25, %v72
    %v81 = vadd.f32 %v25, %v73
    %v82 = vadd.f32 %v25, %v74
    %v83 = vld [vmem:[%s2 + $0x83] ss:$0 sm:$0xff]
    %84 = vset.pattern.permute.xlu0 1
    %85 = vperm.xlu0 %84, %v17
    %v86 = vpop.permute.xlu0 %85
    %88 = vset.pattern.permute.xlu0 1
    %89 = vperm.xlu0 %88, %v18
    %v90 = vpop.permute.xlu0 %89
    %92 = vset.pattern.permute.xlu0 1
    %93 = vperm.xlu0 %92, %v19
    %v94 = vpop.permute.xlu0 %93
    %96 = vset.pattern.permute.xlu0 1
    %97 = vperm.xlu0 %96, %v20
    %v98 = vpop.permute.xlu0 %97
    %100 = vset.pattern.permute.xlu0 1
    %101 = vperm.xlu0 %100, %v21
    %v102 = vpop.permute.xlu0 %101
    %104 = vset.pattern.permute.xlu0 1
    %105 = vperm.xlu0 %104, %v22
    %v106 = vpop.permute.xlu0 %105
    %108 = vset.pattern.permute.xlu0 1
    %109 = vperm.xlu0 %108, %v23
    %v110 = vpop.permute.xlu0 %109
    %112 = vset.pattern.permute.xlu0 1
    %113 = vperm.xlu0 %112, %v24
    %v114 = vpop.permute.xlu0 %113
    %v116 = vmul.f32 %v86, %v83
    %v117 = vmul.f32 %v90, %v83
    %v118 = vmul.f32 %v94, %v83
    %v119 = vmul.f32 %v98, %v83
    %v120 = vmul.f32 %v102, %v83
    %v121 = vmul.f32 %v106, %v83
    %v122 = vmul.f32 %v110, %v83
    %v123 = vmul.f32 %v114, %v83
    %v124 = vadd.f32 %v75, %v116
    %v125 = vadd.f32 %v76, %v117
    %v126 = vadd.f32 %v77, %v118
    %v127 = vadd.f32 %v78, %v119
    %v128 = vadd.f32 %v79, %v120
    %v129 = vadd.f32 %v80, %v121
    %v130 = vadd.f32 %v81, %v122
    %v131 = vadd.f32 %v82, %v123
    %v132 = vmax.f32 %v124, 0.0
    %v133 = vmax.f32 %v125, 0.0
    %v134 = vmax.f32 %v126, 0.0
    %v135 = vmax.f32 %v127, 0.0
    %v136 = vmax.f32 %v128, 0.0
    %v137 = vmax.f32 %v129, 0.0
    %v138 = vmax.f32 %v130, 0.0
    %v139 = vmax.f32 %v131, 0.0
    %v140 = vld [vmem:[%s2] sm:$0xff]
    %v141 = vld [vmem:[%s2 + $0x8] sm:$0xff]
    %v142 = vld [vmem:[%s2 + $0x10] sm:$0xff]
    %v143 = vld [vmem:[%s2 + $0x18] sm:$0xff]
    %v144 = vld [vmem:[%s2 + $0x20] sm:$0xff]
    %v145 = vld [vmem:[%s2 + $0x28] sm:$0xff]
    %v146 = vld [vmem:[%s2 + $0x30] sm:$0xff]
    %v147 = vld [vmem:[%s2 + $0x38] sm:$0xff]
    %s148 = scalar_lea.vmem %s2, 128
    %v149 = vld [vmem:[%s148] ss:$8 sm:$0x3]
    %v151 = vlaneseq
    %v152 = vshrl.u32 %v151, 7
    %v153 = vsub.s32 0, %v152
    %v154 = vrot.slane %v149, %v153
    %v155 = vlaneseq
    %v156 = vshrl.u32 %v155, 7
    %v157 = vsub.s32 1, %v156
    %v158 = vrot.slane %v149, %v157
    %vm161 = vcmask 261120
    %v163 = vsel %vm161, %v132, 0
    %v166 = vsel %vm161, %v133, 0
    %v169 = vsel %vm161, %v134, 0
    %v172 = vsel %vm161, %v135, 0
    %v175 = vsel %vm161, %v136, 0
    %v178 = vsel %vm161, %v137, 0
    %v181 = vsel %vm161, %v138, 0
    %v184 = vsel %vm161, %v139, 0
    %186 = vmatprep.subr.mxu0 %v141
    %187 = vmatpush1.msra.mxu0 %v140
    %188 = vmatprep.subr.mxu0 %v143
    %189 = vmatpush1.msra.mxu0 %v142
    %190 = vmatprep.subr.mxu0 %v145
    %191 = vmatpush1.msra.mxu0 %v144
    %192 = vmatprep.subr.mxu0 %v147
    %193 = vmatpush1.msra.mxu0 %v146
    %194 = vmatprep.subr.mxu0 0.0
    %195 = vmatpush1.msra.mxu0 0.0
    %196 = vmatprep.subr.mxu0 0.0
    %197 = vmatpush1.msra.mxu0 0.0
    %198 = vmatprep.subr.mxu0 0.0
    %199 = vmatpush1.msra.mxu0 0.0
    %200 = vmatprep.subr.mxu0 0.0
    %201 = vmatpush1.msra.mxu0 0.0
    %202 = vmatprep.subr.mxu0 0.0
    %203 = vmatpush1.msra.mxu0 0.0
    %204 = vmatprep.subr.mxu0 0.0
    %205 = vmatpush1.msra.mxu0 0.0
    %206 = vmatprep.subr.mxu0 0.0
    %207 = vmatpush1.msra.mxu0 0.0
    %208 = vmatprep.subr.mxu0 0.0
    %209 = vmatpush1.msra.mxu0 0.0
    %210 = vmatprep.subr.mxu0 0.0
    %211 = vmatpush1.msra.mxu0 0.0
    %212 = vmatprep.subr.mxu0 0.0
    %213 = vmatpush1.msra.mxu0 0.0
    %214 = vmatprep.subr.mxu0 0.0
    %215 = vmatpush1.msra.mxu0 0.0
    %216 = vmatprep.subr.mxu0 0.0
    %217 = vmatpush1.msra.mxu0 0.0
    %218 = vmatprep.subr.mxu0 0.0
    %219 = vmatpush1.msra.mxu0 0.0
    %220 = vmatprep.subr.mxu0 0.0
    %221 = vmatpush1.msra.mxu0 0.0
    %222 = vmatprep.subr.mxu0 0.0
    %223 = vmatpush1.msra.mxu0 0.0
    %224 = vmatprep.subr.mxu0 0.0
    %225 = vmatpush1.msra.mxu0 0.0
    %226 = vmatprep.subr.mxu0 0.0
    %227 = vmatpush1.msra.mxu0 0.0
    %228 = vmatprep.subr.mxu0 0.0
    %229 = vmatpush1.msra.mxu0 0.0
    %230 = vmatprep.subr.mxu0 0.0
    %231 = vmatpush1.msra.mxu0 0.0
    %232 = vmatprep.subr.mxu0 0.0
    %233 = vmatpush1.msra.mxu0 0.0
    %234 = vmatprep.subr.mxu0 0.0
    %235 = vmatpush1.msra.mxu0 0.0
    %236 = vmatprep.subr.mxu0 0.0
    %237 = vmatpush1.msra.mxu0 0.0
    %238 = vmatprep.subr.mxu0 0.0
    %239 = vmatpush1.msra.mxu0 0.0
    %240 = vmatprep.subr.mxu0 0.0
    %241 = vmatpush1.msra.mxu0 0.0
    %242 = vmatprep.subr.mxu0 0.0
    %243 = vmatpush1.msra.mxu0 0.0
    %244 = vmatprep.subr.mxu0 0.0
    %245 = vmatpush1.msra.mxu0 0.0
    %246 = vmatprep.subr.mxu0 0.0
    %247 = vmatpush1.msra.mxu0 0.0
    %248 = vmatprep.subr.mxu0 0.0
    %249 = vmatpush1.msra.mxu0 0.0
    %250 = vmatprep.mubr.f32.mxu0 0.0
    %251 = vmatmul.mubr.f32.gmra.mrb[0].mxu0 %v163
    %v252 = vpop.f32.mrb[0].mxu0
    %v253 = vadd.f32 %v154, %v252
    %v254 = vpop.f32.mrb[0].mxu0
    %v255 = vadd.f32 %v158, %v254
    %256 = vmatprep.mubr.f32.mxu0 0.0
    %257 = vmatmul.mubr.f32.gmra.mrb[0].mxu0 %v166
    %v258 = vpop.f32.mrb[0].mxu0
    %v259 = vadd.f32 %v154, %v258
    %v260 = vpop.f32.mrb[0].mxu0
    %v261 = vadd.f32 %v158, %v260
    %262 = vmatprep.mubr.f32.mxu0 0.0
    %263 = vmatmul.mubr.f32.gmra.mrb[0].mxu0 %v169
    %v264 = vpop.f32.mrb[0].mxu0
    %v265 = vadd.f32 %v154, %v264
    %v266 = vpop.f32.mrb[0].mxu0
    %v267 = vadd.f32 %v158, %v266
    %268 = vmatprep.mubr.f32.mxu0 0.0
    %269 = vmatmul.mubr.f32.gmra.mrb[0].mxu0 %v172
    %v270 = vpop.f32.mrb[0].mxu0
    %v271 = vadd.f32 %v154, %v270
    %v272 = vpop.f32.mrb[0].mxu0
    %v273 = vadd.f32 %v158, %v272
    %274 = vmatprep.mubr.f32.mxu0 0.0
    %275 = vmatmul.mubr.f32.gmra.mrb[0].mxu0 %v175
    %v276 = vpop.f32.mrb[0].mxu0
    %v277 = vadd.f32 %v154, %v276
    %v278 = vpop.f32.mrb[0].mxu0
    %v279 = vadd.f32 %v158, %v278
    %280 = vmatprep.mubr.f32.mxu0 0.0
    %281 = vmatmul.mubr.f32.gmra.mrb[0].mxu0 %v178
    %v282 = vpop.f32.mrb[0].mxu0
    %v283 = vadd.f32 %v154, %v282
    %v284 = vpop.f32.mrb[0].mxu0
    %v285 = vadd.f32 %v158, %v284
    %286 = vmatprep.mubr.f32.mxu0 0.0
    %287 = vmatmul.mubr.f32.gmra.mrb[0].mxu0 %v181
    %v288 = vpop.f32.mrb[0].mxu0
    %v289 = vadd.f32 %v154, %v288
    %v290 = vpop.f32.mrb[0].mxu0
    %v291 = vadd.f32 %v158, %v290
    %292 = vmatprep.mubr.f32.mxu0 0.0
    %293 = vmatmul.mubr.f32.gmra.mrb[0].mxu0 %v184
    %v294 = vpop.f32.mrb[0].mxu0
    %v295 = vadd.f32 %v154, %v294
    %v296 = vpop.f32.mrb[0].mxu0
    %v297 = vadd.f32 %v158, %v296
    %298 = vdwg.mxu0
    %v299 = vld [vmem:[%s2 + $0x40] sm:$0xff]
    %v300 = vld [vmem:[%s2 + $0x50] sm:$0xff]
    %v301 = vld [vmem:[%s2 + $0x60] sm:$0xff]
    %v302 = vld [vmem:[%s2 + $0x70] sm:$0xff]
    %v303 = vld [vmem:[%s2 + $0x48] sm:$0xff]
    %v304 = vld [vmem:[%s2 + $0x58] sm:$0xff]
    %v305 = vld [vmem:[%s2 + $0x68] sm:$0xff]
    %v306 = vld [vmem:[%s2 + $0x78] sm:$0xff]
    %v308 = vsel %vm161, 0.0, 0
    %310 = vmatprep.subr.mxu0 0.0
    %311 = vmatpush1.msra.mxu0 %v299
    %312 = vmatprep.subr.mxu0 0.0
    %313 = vmatpush1.msra.mxu0 %v300
    %314 = vmatprep.subr.mxu0 0.0
    %315 = vmatpush1.msra.mxu0 %v301
    %316 = vmatprep.subr.mxu0 0.0
    %317 = vmatpush1.msra.mxu0 %v302
    %318 = vmatprep.subr.mxu0 0.0
    %319 = vmatpush1.msra.mxu0 0.0
    %320 = vmatprep.subr.mxu0 0.0
    %321 = vmatpush1.msra.mxu0 0.0
    %322 = vmatprep.subr.mxu0 0.0
    %323 = vmatpush1.msra.mxu0 0.0
    %324 = vmatprep.subr.mxu0 0.0
    %325 = vmatpush1.msra.mxu0 0.0
    %326 = vmatprep.subr.mxu0 0.0
    %327 = vmatpush1.msra.mxu0 0.0
    %328 = vmatprep.subr.mxu0 0.0
    %329 = vmatpush1.msra.mxu0 0.0
    %330 = vmatprep.subr.mxu0 0.0
    %331 = vmatpush1.msra.mxu0 0.0
    %332 = vmatprep.subr.mxu0 0.0
    %333 = vmatpush1.msra.mxu0 0.0
    %334 = vmatprep.subr.mxu0 0.0
    %335 = vmatpush1.msra.mxu0 0.0
    %336 = vmatprep.subr.mxu0 0.0
    %337 = vmatpush1.msra.mxu0 0.0
    %338 = vmatprep.subr.mxu0 0.0
    %339 = vmatpush1.msra.mxu0 0.0
    %340 = vmatprep.subr.mxu0 0.0
    %341 = vmatpush1.msra.mxu0 0.0
    %342 = vmatprep.subr.mxu0 0.0
    %343 = vmatpush1.msra.mxu0 0.0
    %344 = vmatprep.subr.mxu0 0.0
    %345 = vmatpush1.msra.mxu0 0.0
    %346 = vmatprep.subr.mxu0 0.0
    %347 = vmatpush1.msra.mxu0 0.0
    %348 = vmatprep.subr.mxu0 0.0
    %349 = vmatpush1.msra.mxu0 0.0
    %350 = vmatprep.subr.mxu0 0.0
    %351 = vmatpush1.msra.mxu0 0.0
    %352 = vmatprep.subr.mxu0 0.0
    %353 = vmatpush1.msra.mxu0 0.0
    %354 = vmatprep.subr.mxu0 0.0
    %355 = vmatpush1.msra.mxu0 0.0
    %356 = vmatprep.subr.mxu0 0.0
    %357 = vmatpush1.msra.mxu0 0.0
    %358 = vmatprep.subr.mxu0 0.0
    %359 = vmatpush1.msra.mxu0 0.0
    %360 = vmatprep.subr.mxu0 0.0
    %361 = vmatpush1.msra.mxu0 0.0
    %362 = vmatprep.subr.mxu0 0.0
    %363 = vmatpush1.msra.mxu0 0.0
    %364 = vmatprep.subr.mxu0 0.0
    %365 = vmatpush1.msra.mxu0 0.0
    %366 = vmatprep.subr.mxu0 0.0
    %367 = vmatpush1.msra.mxu0 0.0
    %368 = vmatprep.subr.mxu0 0.0
    %369 = vmatpush1.msra.mxu0 0.0
    %370 = vmatprep.subr.mxu0 0.0
    %371 = vmatpush1.msra.mxu0 0.0
    %372 = vmatprep.subr.mxu0 0.0
    %373 = vmatpush1.msra.mxu0 0.0
    %374 = vmatprep.mubr.f32.mxu0 0.0
    %375 = vmatmul.mubr.f32.gmra.mrb[0].mxu0 %v308
    %v376 = vpop.f32.mrb[0].mxu0
    %v377 = vadd.f32 0.0, %v376
    %v378 = vpop.f32.mrb[0].mxu0
    %379 = vdwg.mxu0
    %v380 = vadd.f32 %v253, %v377
    %v381 = vxor.u32 %v380, 2147483648
    %v382 = vmul.f32 %v381, 1.442695
    %v383 = vpow.pop %v382
    %v384 = vadd.f32 %v383, 1.0
    %v385 = vrcp.pop %v384
    %v386 = vmul.f32 1.0, %v385
    %v387 = vmul.f32 %v386, 2.0
    %v388 = vsub.f32 %v387, 1.0
    %v389 = vmul.f32 %v386, 0.0
    %391 = vrot.lane.b32.xlu0 %v388, 64
    %v392 = vpop.permute.xlu0 %391
    %v394 = vmul.f32 %v386, %v392
    %396 = vrot.lane.b32.xlu0 %v394, 32
    %v397 = vpop.permute.xlu0 %396
    %v399 = vadd.f32 %v389, %v397
    %v400 = vtanh.pop %v399
    %402 = vrot.lane.b32.xlu0 %v400, 64
    %v403 = vpop.permute.xlu0 %402
    %v405 = vmul.f32 %v386, %v403
    %407 = vrot.lane.b32.xlu0 %v405, 32
    %v408 = vpop.permute.xlu0 %407
    %v409 = vsel %vm161, %v408, 0
    %411 = vmatprep.subr.mxu0 0.0
    %412 = vmatpush1.msra.mxu0 %v299
    %413 = vmatprep.subr.mxu0 0.0
    %414 = vmatpush1.msra.mxu0 %v300
    %415 = vmatprep.subr.mxu0 0.0
    %416 = vmatpush1.msra.mxu0 %v301
    %417 = vmatprep.subr.mxu0 0.0
    %418 = vmatpush1.msra.mxu0 %v302
    %419 = vmatprep.subr.mxu0 0.0
    %420 = vmatpush1.msra.mxu0 0.0
    %421 = vmatprep.subr.mxu0 0.0
    %422 = vmatpush1.msra.mxu0 0.0
    %423 = vmatprep.subr.mxu0 0.0
    %424 = vmatpush1.msra.mxu0 0.0
    %425 = vmatprep.subr.mxu0 0.0
    %426 = vmatpush1.msra.mxu0 0.0
    %427 = vmatprep.subr.mxu0 0.0
    %428 = vmatpush1.msra.mxu0 0.0
    %429 = vmatprep.subr.mxu0 0.0
    %430 = vmatpush1.msra.mxu0 0.0
    %431 = vmatprep.subr.mxu0 0.0
    %432 = vmatpush1.msra.mxu0 0.0
    %433 = vmatprep.subr.mxu0 0.0
    %434 = vmatpush1.msra.mxu0 0.0
    %435 = vmatprep.subr.mxu0 0.0
    %436 = vmatpush1.msra.mxu0 0.0
    %437 = vmatprep.subr.mxu0 0.0
    %438 = vmatpush1.msra.mxu0 0.0
    %439 = vmatprep.subr.mxu0 0.0
    %440 = vmatpush1.msra.mxu0 0.0
    %441 = vmatprep.subr.mxu0 0.0
    %442 = vmatpush1.msra.mxu0 0.0
    %443 = vmatprep.subr.mxu0 0.0
    %444 = vmatpush1.msra.mxu0 0.0
    %445 = vmatprep.subr.mxu0 0.0
    %446 = vmatpush1.msra.mxu0 0.0
    %447 = vmatprep.subr.mxu0 0.0
    %448 = vmatpush1.msra.mxu0 0.0
    %449 = vmatprep.subr.mxu0 0.0
    %450 = vmatpush1.msra.mxu0 0.0
    %451 = vmatprep.subr.mxu0 0.0
    %452 = vmatpush1.msra.mxu0 0.0
    %453 = vmatprep.subr.mxu0 0.0
    %454 = vmatpush1.msra.mxu0 0.0
    %455 = vmatprep.subr.mxu0 0.0
    %456 = vmatpush1.msra.mxu0 0.0
    %457 = vmatprep.subr.mxu0 0.0
    %458 = vmatpush1.msra.mxu0 0.0
    %459 = vmatprep.subr.mxu0 0.0
    %460 = vmatpush1.msra.mxu0 0.0
    %461 = vmatprep.subr.mxu0 0.0
    %462 = vmatpush1.msra.mxu0 0.0
    %463 = vmatprep.subr.mxu0 0.0
    %464 = vmatpush1.msra.mxu0 0.0
    %465 = vmatprep.subr.mxu0 0.0
    %466 = vmatpush1.msra.mxu0 0.0
    %467 = vmatprep.subr.mxu0 0.0
    %468 = vmatpush1.msra.mxu0 0.0
    %469 = vmatprep.subr.mxu0 0.0
    %470 = vmatpush1.msra.mxu0 0.0
    %471 = vmatprep.subr.mxu0 0.0
    %472 = vmatpush1.msra.mxu0 0.0
    %473 = vmatprep.subr.mxu0 0.0
    %474 = vmatpush1.msra.mxu0 0.0
    %475 = vmatprep.mubr.f32.mxu0 0.0
    %476 = vmatmul.mubr.f32.gmra.mrb[0].mxu0 %v409
    %v477 = vpop.f32.mrb[0].mxu0
    %v478 = vadd.f32 0.0, %v477
    %v479 = vpop.f32.mrb[0].mxu0
    %480 = vdwg.mxu0
    %v481 = vadd.f32 %v259, %v478
    %v482 = vxor.u32 %v481, 2147483648
    %v483 = vmul.f32 %v482, 1.442695
    %v484 = vpow.pop %v483
    %v485 = vadd.f32 %v484, 1.0
    %v486 = vrcp.pop %v485
    %v487 = vmul.f32 1.0, %v486
    %v488 = vmul.f32 %v487, 2.0
    %v489 = vsub.f32 %v488, 1.0
    %v490 = vmul.f32 %v487, %v399
    %492 = vrot.lane.b32.xlu0 %v489, 64
    %v493 = vpop.permute.xlu0 %492
    %v495 = vmul.f32 %v487, %v493
    %497 = vrot.lane.b32.xlu0 %v495, 32
    %v498 = vpop.permute.xlu0 %497
    %v500 = vadd.f32 %v490, %v498
    %v501 = vtanh.pop %v500
    %503 = vrot.lane.b32.xlu0 %v501, 64
    %v504 = vpop.permute.xlu0 %503
    %v506 = vmul.f32 %v487, %v504
    %508 = vrot.lane.b32.xlu0 %v506, 32
    %v509 = vpop.permute.xlu0 %508
    %v510 = vsel %vm161, %v509, 0
    %512 = vmatprep.subr.mxu0 0.0
    %513 = vmatpush1.msra.mxu0 %v299
    %514 = vmatprep.subr.mxu0 0.0
    %515 = vmatpush1.msra.mxu0 %v300
    %516 = vmatprep.subr.mxu0 0.0
    %517 = vmatpush1.msra.mxu0 %v301
    %518 = vmatprep.subr.mxu0 0.0
    %519 = vmatpush1.msra.mxu0 %v302
    %520 = vmatprep.subr.mxu0 0.0
    %521 = vmatpush1.msra.mxu0 0.0
    %522 = vmatprep.subr.mxu0 0.0
    %523 = vmatpush1.msra.mxu0 0.0
    %524 = vmatprep.subr.mxu0 0.0
    %525 = vmatpush1.msra.mxu0 0.0
    %526 = vmatprep.subr.mxu0 0.0
    %527 = vmatpush1.msra.mxu0 0.0
    %528 = vmatprep.subr.mxu0 0.0
    %529 = vmatpush1.msra.mxu0 0.0
    %530 = vmatprep.subr.mxu0 0.0
    %531 = vmatpush1.msra.mxu0 0.0
    %532 = vmatprep.subr.mxu0 0.0
    %533 = vmatpush1.msra.mxu0 0.0
    %534 = vmatprep.subr.mxu0 0.0
    %535 = vmatpush1.msra.mxu0 0.0
    %536 = vmatprep.subr.mxu0 0.0
    %537 = vmatpush1.msra.mxu0 0.0
    %538 = vmatprep.subr.mxu0 0.0
    %539 = vmatpush1.msra.mxu0 0.0
    %540 = vmatprep.subr.mxu0 0.0
    %541 = vmatpush1.msra.mxu0 0.0
    %542 = vmatprep.subr.mxu0 0.0
    %543 = vmatpush1.msra.mxu0 0.0
    %544 = vmatprep.subr.mxu0 0.0
    %545 = vmatpush1.msra.mxu0 0.0
    %546 = vmatprep.subr.mxu0 0.0
    %547 = vmatpush1.msra.mxu0 0.0
    %548 = vmatprep.subr.mxu0 0.0
    %549 = vmatpush1.msra.mxu0 0.0
    %550 = vmatprep.subr.mxu0 0.0
    %551 = vmatpush1.msra.mxu0 0.0
    %552 = vmatprep.subr.mxu0 0.0
    %553 = vmatpush1.msra.mxu0 0.0
    %554 = vmatprep.subr.mxu0 0.0
    %555 = vmatpush1.msra.mxu0 0.0
    %556 = vmatprep.subr.mxu0 0.0
    %557 = vmatpush1.msra.mxu0 0.0
    %558 = vmatprep.subr.mxu0 0.0
    %559 = vmatpush1.msra.mxu0 0.0
    %560 = vmatprep.subr.mxu0 0.0
    %561 = vmatpush1.msra.mxu0 0.0
    %562 = vmatprep.subr.mxu0 0.0
    %563 = vmatpush1.msra.mxu0 0.0
    %564 = vmatprep.subr.mxu0 0.0
    %565 = vmatpush1.msra.mxu0 0.0
    %566 = vmatprep.subr.mxu0 0.0
    %567 = vmatpush1.msra.mxu0 0.0
    %568 = vmatprep.subr.mxu0 0.0
    %569 = vmatpush1.msra.mxu0 0.0
    %570 = vmatprep.subr.mxu0 0.0
    %571 = vmatpush1.msra.mxu0 0.0
    %572 = vmatprep.subr.mxu0 0.0
    %573 = vmatpush1.msra.mxu0 0.0
    %574 = vmatprep.subr.mxu0 0.0
    %575 = vmatpush1.msra.mxu0 0.0
    %576 = vmatprep.mubr.f32.mxu0 0.0
    %577 = vmatmul.mubr.f32.gmra.mrb[0].mxu0 %v510
    %v578 = vpop.f32.mrb[0].mxu0
    %v579 = vadd.f32 0.0, %v578
    %v580 = vpop.f32.mrb[0].mxu0
    %581 = vdwg.mxu0
    %v582 = vadd.f32 %v265, %v579
    %v583 = vxor.u32 %v582, 2147483648
    %v584 = vmul.f32 %v583, 1.442695
    %v585 = vpow.pop %v584
    %v586 = vadd.f32 %v585, 1.0
    %v587 = vrcp.pop %v586
    %v588 = vmul.f32 1.0, %v587
    %v589 = vmul.f32 %v588, 2.0
    %v590 = vsub.f32 %v589, 1.0
    %v591 = vmul.f32 %v588, %v500
    %593 = vrot.lane.b32.xlu0 %v590, 64
    %v594 = vpop.permute.xlu0 %593
    %v596 = vmul.f32 %v588, %v594
    %598 = vrot.lane.b32.xlu0 %v596, 32
    %v599 = vpop.permute.xlu0 %598
    %v601 = vadd.f32 %v591, %v599
    %v602 = vtanh.pop %v601
    %604 = vrot.lane.b32.xlu0 %v602, 64
    %v605 = vpop.permute.xlu0 %604
    %v607 = vmul.f32 %v588, %v605
    %609 = vrot.lane.b32.xlu0 %v607, 32
    %v610 = vpop.permute.xlu0 %609
    %v611 = vsel %vm161, %v610, 0
    %613 = vmatprep.subr.mxu0 0.0
    %614 = vmatpush1.msra.mxu0 %v299
    %615 = vmatprep.subr.mxu0 0.0
    %616 = vmatpush1.msra.mxu0 %v300
    %617 = vmatprep.subr.mxu0 0.0
    %618 = vmatpush1.msra.mxu0 %v301
    %619 = vmatprep.subr.mxu0 0.0
    %620 = vmatpush1.msra.mxu0 %v302
    %621 = vmatprep.subr.mxu0 0.0
    %622 = vmatpush1.msra.mxu0 0.0
    %623 = vmatprep.subr.mxu0 0.0
    %624 = vmatpush1.msra.mxu0 0.0
    %625 = vmatprep.subr.mxu0 0.0
    %626 = vmatpush1.msra.mxu0 0.0
    %627 = vmatprep.subr.mxu0 0.0
    %628 = vmatpush1.msra.mxu0 0.0
    %629 = vmatprep.subr.mxu0 0.0
    %630 = vmatpush1.msra.mxu0 0.0
    %631 = vmatprep.subr.mxu0 0.0
    %632 = vmatpush1.msra.mxu0 0.0
    %633 = vmatprep.subr.mxu0 0.0
    %634 = vmatpush1.msra.mxu0 0.0
    %635 = vmatprep.subr.mxu0 0.0
    %636 = vmatpush1.msra.mxu0 0.0
    %637 = vmatprep.subr.mxu0 0.0
    %638 = vmatpush1.msra.mxu0 0.0
    %639 = vmatprep.subr.mxu0 0.0
    %640 = vmatpush1.msra.mxu0 0.0
    %641 = vmatprep.subr.mxu0 0.0
    %642 = vmatpush1.msra.mxu0 0.0
    %643 = vmatprep.subr.mxu0 0.0
    %644 = vmatpush1.msra.mxu0 0.0
    %645 = vmatprep.subr.mxu0 0.0
    %646 = vmatpush1.msra.mxu0 0.0
    %647 = vmatprep.subr.mxu0 0.0
    %648 = vmatpush1.msra.mxu0 0.0
    %649 = vmatprep.subr.mxu0 0.0
    %650 = vmatpush1.msra.mxu0 0.0
    %651 = vmatprep.subr.mxu0 0.0
    %652 = vmatpush1.msra.mxu0 0.0
    %653 = vmatprep.subr.mxu0 0.0
    %654 = vmatpush1.msra.mxu0 0.0
    %655 = vmatprep.subr.mxu0 0.0
    %656 = vmatpush1.msra.mxu0 0.0
    %657 = vmatprep.subr.mxu0 0.0
    %658 = vmatpush1.msra.mxu0 0.0
    %659 = vmatprep.subr.mxu0 0.0
    %660 = vmatpush1.msra.mxu0 0.0
    %661 = vmatprep.subr.mxu0 0.0
    %662 = vmatpush1.msra.mxu0 0.0
    %663 = vmatprep.subr.mxu0 0.0
    %664 = vmatpush1.msra.mxu0 0.0
    %665 = vmatprep.subr.mxu0 0.0
    %666 = vmatpush1.msra.mxu0 0.0
    %667 = vmatprep.subr.mxu0 0.0
    %668 = vmatpush1.msra.mxu0 0.0
    %669 = vmatprep.subr.mxu0 0.0
    %670 = vmatpush1.msra.mxu0 0.0
    %671 = vmatprep.subr.mxu0 0.0
    %672 = vmatpush1.msra.mxu0 0.0
    %673 = vmatprep.subr.mxu0 0.0
    %674 = vmatpush1.msra.mxu0 0.0
    %675 = vmatprep.subr.mxu0 0.0
    %676 = vmatpush1.msra.mxu0 0.0
    %677 = vmatprep.mubr.f32.mxu0 0.0
    %678 = vmatmul.mubr.f32.gmra.mrb[0].mxu0 %v611
    %v679 = vpop.f32.mrb[0].mxu0
    %v680 = vadd.f32 0.0, %v679
    %v681 = vpop.f32.mrb[0].mxu0
    %682 = vdwg.mxu0
    %v683 = vadd.f32 %v271, %v680
    %v684 = vxor.u32 %v683, 2147483648
    %v685 = vmul.f32 %v684, 1.442695
    %v686 = vpow.pop %v685
    %v687 = vadd.f32 %v686, 1.0
    %v688 = vrcp.pop %v687
    %v689 = vmul.f32 1.0, %v688
    %v690 = vmul.f32 %v689, 2.0
    %v691 = vsub.f32 %v690, 1.0
    %v692 = vmul.f32 %v689, %v601
    %694 = vrot.lane.b32.xlu0 %v691, 64
    %v695 = vpop.permute.xlu0 %694
    %v697 = vmul.f32 %v689, %v695
    %699 = vrot.lane.b32.xlu0 %v697, 32
    %v700 = vpop.permute.xlu0 %699
    %v702 = vadd.f32 %v692, %v700
    %v703 = vtanh.pop %v702
    %705 = vrot.lane.b32.xlu0 %v703, 64
    %v706 = vpop.permute.xlu0 %705
    %v708 = vmul.f32 %v689, %v706
    %710 = vrot.lane.b32.xlu0 %v708, 32
    %v711 = vpop.permute.xlu0 %710
    %v712 = vsel %vm161, %v711, 0
    %714 = vmatprep.subr.mxu0 0.0
    %715 = vmatpush1.msra.mxu0 %v299
    %716 = vmatprep.subr.mxu0 0.0
    %717 = vmatpush1.msra.mxu0 %v300
    %718 = vmatprep.subr.mxu0 0.0
    %719 = vmatpush1.msra.mxu0 %v301
    %720 = vmatprep.subr.mxu0 0.0
    %721 = vmatpush1.msra.mxu0 %v302
    %722 = vmatprep.subr.mxu0 0.0
    %723 = vmatpush1.msra.mxu0 0.0
    %724 = vmatprep.subr.mxu0 0.0
    %725 = vmatpush1.msra.mxu0 0.0
    %726 = vmatprep.subr.mxu0 0.0
    %727 = vmatpush1.msra.mxu0 0.0
    %728 = vmatprep.subr.mxu0 0.0
    %729 = vmatpush1.msra.mxu0 0.0
    %730 = vmatprep.subr.mxu0 0.0
    %731 = vmatpush1.msra.mxu0 0.0
    %732 = vmatprep.subr.mxu0 0.0
    %733 = vmatpush1.msra.mxu0 0.0
    %734 = vmatprep.subr.mxu0 0.0
    %735 = vmatpush1.msra.mxu0 0.0
    %736 = vmatprep.subr.mxu0 0.0
    %737 = vmatpush1.msra.mxu0 0.0
    %738 = vmatprep.subr.mxu0 0.0
    %739 = vmatpush1.msra.mxu0 0.0
    %740 = vmatprep.subr.mxu0 0.0
    %741 = vmatpush1.msra.mxu0 0.0
    %742 = vmatprep.subr.mxu0 0.0
    %743 = vmatpush1.msra.mxu0 0.0
    %744 = vmatprep.subr.mxu0 0.0
    %745 = vmatpush1.msra.mxu0 0.0
    %746 = vmatprep.subr.mxu0 0.0
    %747 = vmatpush1.msra.mxu0 0.0
    %748 = vmatprep.subr.mxu0 0.0
    %749 = vmatpush1.msra.mxu0 0.0
    %750 = vmatprep.subr.mxu0 0.0
    %751 = vmatpush1.msra.mxu0 0.0
    %752 = vmatprep.subr.mxu0 0.0
    %753 = vmatpush1.msra.mxu0 0.0
    %754 = vmatprep.subr.mxu0 0.0
    %755 = vmatpush1.msra.mxu0 0.0
    %756 = vmatprep.subr.mxu0 0.0
    %757 = vmatpush1.msra.mxu0 0.0
    %758 = vmatprep.subr.mxu0 0.0
    %759 = vmatpush1.msra.mxu0 0.0
    %760 = vmatprep.subr.mxu0 0.0
    %761 = vmatpush1.msra.mxu0 0.0
    %762 = vmatprep.subr.mxu0 0.0
    %763 = vmatpush1.msra.mxu0 0.0
    %764 = vmatprep.subr.mxu0 0.0
    %765 = vmatpush1.msra.mxu0 0.0
    %766 = vmatprep.subr.mxu0 0.0
    %767 = vmatpush1.msra.mxu0 0.0
    %768 = vmatprep.subr.mxu0 0.0
    %769 = vmatpush1.msra.mxu0 0.0
    %770 = vmatprep.subr.mxu0 0.0
    %771 = vmatpush1.msra.mxu0 0.0
    %772 = vmatprep.subr.mxu0 0.0
    %773 = vmatpush1.msra.mxu0 0.0
    %774 = vmatprep.subr.mxu0 0.0
    %775 = vmatpush1.msra.mxu0 0.0
    %776 = vmatprep.subr.mxu0 0.0
    %777 = vmatpush1.msra.mxu0 0.0
    %778 = vmatprep.mubr.f32.mxu0 0.0
    %779 = vmatmul.mubr.f32.gmra.mrb[0].mxu0 %v712
    %v780 = vpop.f32.mrb[0].mxu0
    %v781 = vadd.f32 0.0, %v780
    %v782 = vpop.f32.mrb[0].mxu0
    %783 = vdwg.mxu0
    %v784 = vadd.f32 %v277, %v781
    %v785 = vxor.u32 %v784, 2147483648
    %v786 = vmul.f32 %v785, 1.442695
    %v787 = vpow.pop %v786
    %v788 = vadd.f32 %v787, 1.0
    %v789 = vrcp.pop %v788
    %v790 = vmul.f32 1.0, %v789
    %v791 = vmul.f32 %v790, 2.0
    %v792 = vsub.f32 %v791, 1.0
    %v793 = vmul.f32 %v790, %v702
    %795 = vrot.lane.b32.xlu0 %v792, 64
    %v796 = vpop.permute.xlu0 %795
    %v798 = vmul.f32 %v790, %v796
    %800 = vrot.lane.b32.xlu0 %v798, 32
    %v801 = vpop.permute.xlu0 %800
    %v803 = vadd.f32 %v793, %v801
    %v804 = vtanh.pop %v803
    %806 = vrot.lane.b32.xlu0 %v804, 64
    %v807 = vpop.permute.xlu0 %806
    %v809 = vmul.f32 %v790, %v807
    %811 = vrot.lane.b32.xlu0 %v809, 32
    %v812 = vpop.permute.xlu0 %811
    %v813 = vsel %vm161, %v812, 0
    %815 = vmatprep.subr.mxu0 0.0
    %816 = vmatpush1.msra.mxu0 %v299
    %817 = vmatprep.subr.mxu0 0.0
    %818 = vmatpush1.msra.mxu0 %v300
    %819 = vmatprep.subr.mxu0 0.0
    %820 = vmatpush1.msra.mxu0 %v301
    %821 = vmatprep.subr.mxu0 0.0
    %822 = vmatpush1.msra.mxu0 %v302
    %823 = vmatprep.subr.mxu0 0.0
    %824 = vmatpush1.msra.mxu0 0.0
    %825 = vmatprep.subr.mxu0 0.0
    %826 = vmatpush1.msra.mxu0 0.0
    %827 = vmatprep.subr.mxu0 0.0
    %828 = vmatpush1.msra.mxu0 0.0
    %829 = vmatprep.subr.mxu0 0.0
    %830 = vmatpush1.msra.mxu0 0.0
    %831 = vmatprep.subr.mxu0 0.0
    %832 = vmatpush1.msra.mxu0 0.0
    %833 = vmatprep.subr.mxu0 0.0
    %834 = vmatpush1.msra.mxu0 0.0
    %835 = vmatprep.subr.mxu0 0.0
    %836 = vmatpush1.msra.mxu0 0.0
    %837 = vmatprep.subr.mxu0 0.0
    %838 = vmatpush1.msra.mxu0 0.0
    %839 = vmatprep.subr.mxu0 0.0
    %840 = vmatpush1.msra.mxu0 0.0
    %841 = vmatprep.subr.mxu0 0.0
    %842 = vmatpush1.msra.mxu0 0.0
    %843 = vmatprep.subr.mxu0 0.0
    %844 = vmatpush1.msra.mxu0 0.0
    %845 = vmatprep.subr.mxu0 0.0
    %846 = vmatpush1.msra.mxu0 0.0
    %847 = vmatprep.subr.mxu0 0.0
    %848 = vmatpush1.msra.mxu0 0.0
    %849 = vmatprep.subr.mxu0 0.0
    %850 = vmatpush1.msra.mxu0 0.0
    %851 = vmatprep.subr.mxu0 0.0
    %852 = vmatpush1.msra.mxu0 0.0
    %853 = vmatprep.subr.mxu0 0.0
    %854 = vmatpush1.msra.mxu0 0.0
    %855 = vmatprep.subr.mxu0 0.0
    %856 = vmatpush1.msra.mxu0 0.0
    %857 = vmatprep.subr.mxu0 0.0
    %858 = vmatpush1.msra.mxu0 0.0
    %859 = vmatprep.subr.mxu0 0.0
    %860 = vmatpush1.msra.mxu0 0.0
    %861 = vmatprep.subr.mxu0 0.0
    %862 = vmatpush1.msra.mxu0 0.0
    %863 = vmatprep.subr.mxu0 0.0
    %864 = vmatpush1.msra.mxu0 0.0
    %865 = vmatprep.subr.mxu0 0.0
    %866 = vmatpush1.msra.mxu0 0.0
    %867 = vmatprep.subr.mxu0 0.0
    %868 = vmatpush1.msra.mxu0 0.0
    %869 = vmatprep.subr.mxu0 0.0
    %870 = vmatpush1.msra.mxu0 0.0
    %871 = vmatprep.subr.mxu0 0.0
    %872 = vmatpush1.msra.mxu0 0.0
    %873 = vmatprep.subr.mxu0 0.0
    %874 = vmatpush1.msra.mxu0 0.0
    %875 = vmatprep.subr.mxu0 0.0
    %876 = vmatpush1.msra.mxu0 0.0
    %877 = vmatprep.subr.mxu0 0.0
    %878 = vmatpush1.msra.mxu0 0.0
    %879 = vmatprep.mubr.f32.mxu0 0.0
    %880 = vmatmul.mubr.f32.gmra.mrb[0].mxu0 %v813
    %v881 = vpop.f32.mrb[0].mxu0
    %v882 = vadd.f32 0.0, %v881
    %v883 = vpop.f32.mrb[0].mxu0
    %884 = vdwg.mxu0
    %v885 = vadd.f32 %v283, %v882
    %v886 = vxor.u32 %v885, 2147483648
    %v887 = vmul.f32 %v886, 1.442695
    %v888 = vpow.pop %v887
    %v889 = vadd.f32 %v888, 1.0
    %v890 = vrcp.pop %v889
    %v891 = vmul.f32 1.0, %v890
    %v892 = vmul.f32 %v891, 2.0
    %v893 = vsub.f32 %v892, 1.0
    %v894 = vmul.f32 %v891, %v803
    %896 = vrot.lane.b32.xlu0 %v893, 64
    %v897 = vpop.permute.xlu0 %896
    %v899 = vmul.f32 %v891, %v897
    %901 = vrot.lane.b32.xlu0 %v899, 32
    %v902 = vpop.permute.xlu0 %901
    %v904 = vadd.f32 %v894, %v902
    %v905 = vtanh.pop %v904
    %907 = vrot.lane.b32.xlu0 %v905, 64
    %v908 = vpop.permute.xlu0 %907
    %v910 = vmul.f32 %v891, %v908
    %912 = vrot.lane.b32.xlu0 %v910, 32
    %v913 = vpop.permute.xlu0 %912
    %v914 = vsel %vm161, %v913, 0
    %916 = vmatprep.subr.mxu0 0.0
    %917 = vmatpush1.msra.mxu0 %v299
    %918 = vmatprep.subr.mxu0 0.0
    %919 = vmatpush1.msra.mxu0 %v300
    %920 = vmatprep.subr.mxu0 0.0
    %921 = vmatpush1.msra.mxu0 %v301
    %922 = vmatprep.subr.mxu0 0.0
    %923 = vmatpush1.msra.mxu0 %v302
    %924 = vmatprep.subr.mxu0 0.0
    %925 = vmatpush1.msra.mxu0 0.0
    %926 = vmatprep.subr.mxu0 0.0
    %927 = vmatpush1.msra.mxu0 0.0
    %928 = vmatprep.subr.mxu0 0.0
    %929 = vmatpush1.msra.mxu0 0.0
    %930 = vmatprep.subr.mxu0 0.0
    %931 = vmatpush1.msra.mxu0 0.0
    %932 = vmatprep.subr.mxu0 0.0
    %933 = vmatpush1.msra.mxu0 0.0
    %934 = vmatprep.subr.mxu0 0.0
    %935 = vmatpush1.msra.mxu0 0.0
    %936 = vmatprep.subr.mxu0 0.0
    %937 = vmatpush1.msra.mxu0 0.0
    %938 = vmatprep.subr.mxu0 0.0
    %939 = vmatpush1.msra.mxu0 0.0
    %940 = vmatprep.subr.mxu0 0.0
    %941 = vmatpush1.msra.mxu0 0.0
    %942 = vmatprep.subr.mxu0 0.0
    %943 = vmatpush1.msra.mxu0 0.0
    %944 = vmatprep.subr.mxu0 0.0
    %945 = vmatpush1.msra.mxu0 0.0
    %946 = vmatprep.subr.mxu0 0.0
    %947 = vmatpush1.msra.mxu0 0.0
    %948 = vmatprep.subr.mxu0 0.0
    %949 = vmatpush1.msra.mxu0 0.0
    %950 = vmatprep.subr.mxu0 0.0
    %951 = vmatpush1.msra.mxu0 0.0
    %952 = vmatprep.subr.mxu0 0.0
    %953 = vmatpush1.msra.mxu0 0.0
    %954 = vmatprep.subr.mxu0 0.0
    %955 = vmatpush1.msra.mxu0 0.0
    %956 = vmatprep.subr.mxu0 0.0
    %957 = vmatpush1.msra.mxu0 0.0
    %958 = vmatprep.subr.mxu0 0.0
    %959 = vmatpush1.msra.mxu0 0.0
    %960 = vmatprep.subr.mxu0 0.0
    %961 = vmatpush1.msra.mxu0 0.0
    %962 = vmatprep.subr.mxu0 0.0
    %963 = vmatpush1.msra.mxu0 0.0
    %964 = vmatprep.subr.mxu0 0.0
    %965 = vmatpush1.msra.mxu0 0.0
    %966 = vmatprep.subr.mxu0 0.0
    %967 = vmatpush1.msra.mxu0 0.0
    %968 = vmatprep.subr.mxu0 0.0
    %969 = vmatpush1.msra.mxu0 0.0
    %970 = vmatprep.subr.mxu0 0.0
    %971 = vmatpush1.msra.mxu0 0.0
    %972 = vmatprep.subr.mxu0 0.0
    %973 = vmatpush1.msra.mxu0 0.0
    %974 = vmatprep.subr.mxu0 0.0
    %975 = vmatpush1.msra.mxu0 0.0
    %976 = vmatprep.subr.mxu0 0.0
    %977 = vmatpush1.msra.mxu0 0.0
    %978 = vmatprep.subr.mxu0 0.0
    %979 = vmatpush1.msra.mxu0 0.0
    %980 = vmatprep.mubr.f32.mxu0 0.0
    %981 = vmatmul.mubr.f32.gmra.mrb[0].mxu0 %v914
    %v982 = vpop.f32.mrb[0].mxu0
    %v983 = vadd.f32 0.0, %v982
    %v984 = vpop.f32.mrb[0].mxu0
    %985 = vdwg.mxu0
    %v986 = vadd.f32 %v289, %v983
    %v987 = vxor.u32 %v986, 2147483648
    %v988 = vmul.f32 %v987, 1.442695
    %v989 = vpow.pop %v988
    %v990 = vadd.f32 %v989, 1.0
    %v991 = vrcp.pop %v990
    %v992 = vmul.f32 1.0, %v991
    %v993 = vmul.f32 %v992, 2.0
    %v994 = vsub.f32 %v993, 1.0
    %v995 = vmul.f32 %v992, %v904
    %997 = vrot.lane.b32.xlu0 %v994, 64
    %v998 = vpop.permute.xlu0 %997
    %v1000 = vmul.f32 %v992, %v998
    %1002 = vrot.lane.b32.xlu0 %v1000, 32
    %v1003 = vpop.permute.xlu0 %1002
    %v1005 = vadd.f32 %v995, %v1003
    %v1006 = vtanh.pop %v1005
    %1008 = vrot.lane.b32.xlu0 %v1006, 64
    %v1009 = vpop.permute.xlu0 %1008
    %v1011 = vmul.f32 %v992, %v1009
    %1013 = vrot.lane.b32.xlu0 %v1011, 32
    %v1014 = vpop.permute.xlu0 %1013
    %v1015 = vsel %vm161, %v1014, 0
    %1017 = vmatprep.subr.mxu0 0.0
    %1018 = vmatpush1.msra.mxu0 %v299
    %1019 = vmatprep.subr.mxu0 0.0
    %1020 = vmatpush1.msra.mxu0 %v300
    %1021 = vmatprep.subr.mxu0 0.0
    %1022 = vmatpush1.msra.mxu0 %v301
    %1023 = vmatprep.subr.mxu0 0.0
    %1024 = vmatpush1.msra.mxu0 %v302
    %1025 = vmatprep.subr.mxu0 0.0
    %1026 = vmatpush1.msra.mxu0 0.0
    %1027 = vmatprep.subr.mxu0 0.0
    %1028 = vmatpush1.msra.mxu0 0.0
    %1029 = vmatprep.subr.mxu0 0.0
    %1030 = vmatpush1.msra.mxu0 0.0
    %1031 = vmatprep.subr.mxu0 0.0
    %1032 = vmatpush1.msra.mxu0 0.0
    %1033 = vmatprep.subr.mxu0 0.0
    %1034 = vmatpush1.msra.mxu0 0.0
    %1035 = vmatprep.subr.mxu0 0.0
    %1036 = vmatpush1.msra.mxu0 0.0
    %1037 = vmatprep.subr.mxu0 0.0
    %1038 = vmatpush1.msra.mxu0 0.0
    %1039 = vmatprep.subr.mxu0 0.0
    %1040 = vmatpush1.msra.mxu0 0.0
    %1041 = vmatprep.subr.mxu0 0.0
    %1042 = vmatpush1.msra.mxu0 0.0
    %1043 = vmatprep.subr.mxu0 0.0
    %1044 = vmatpush1.msra.mxu0 0.0
    %1045 = vmatprep.subr.mxu0 0.0
    %1046 = vmatpush1.msra.mxu0 0.0
    %1047 = vmatprep.subr.mxu0 0.0
    %1048 = vmatpush1.msra.mxu0 0.0
    %1049 = vmatprep.subr.mxu0 0.0
    %1050 = vmatpush1.msra.mxu0 0.0
    %1051 = vmatprep.subr.mxu0 0.0
    %1052 = vmatpush1.msra.mxu0 0.0
    %1053 = vmatprep.subr.mxu0 0.0
    %1054 = vmatpush1.msra.mxu0 0.0
    %1055 = vmatprep.subr.mxu0 0.0
    %1056 = vmatpush1.msra.mxu0 0.0
    %1057 = vmatprep.subr.mxu0 0.0
    %1058 = vmatpush1.msra.mxu0 0.0
    %1059 = vmatprep.subr.mxu0 0.0
    %1060 = vmatpush1.msra.mxu0 0.0
    %1061 = vmatprep.subr.mxu0 0.0
    %1062 = vmatpush1.msra.mxu0 0.0
    %1063 = vmatprep.subr.mxu0 0.0
    %1064 = vmatpush1.msra.mxu0 0.0
    %1065 = vmatprep.subr.mxu0 0.0
    %1066 = vmatpush1.msra.mxu0 0.0
    %1067 = vmatprep.subr.mxu0 0.0
    %1068 = vmatpush1.msra.mxu0 0.0
    %1069 = vmatprep.subr.mxu0 0.0
    %1070 = vmatpush1.msra.mxu0 0.0
    %1071 = vmatprep.subr.mxu0 0.0
    %1072 = vmatpush1.msra.mxu0 0.0
    %1073 = vmatprep.subr.mxu0 0.0
    %1074 = vmatpush1.msra.mxu0 0.0
    %1075 = vmatprep.subr.mxu0 0.0
    %1076 = vmatpush1.msra.mxu0 0.0
    %1077 = vmatprep.subr.mxu0 0.0
    %1078 = vmatpush1.msra.mxu0 0.0
    %1079 = vmatprep.subr.mxu0 0.0
    %1080 = vmatpush1.msra.mxu0 0.0
    %1081 = vmatprep.mubr.f32.mxu0 0.0
    %1082 = vmatmul.mubr.f32.gmra.mrb[0].mxu0 %v1015
    %v1083 = vpop.f32.mrb[0].mxu0
    %v1084 = vadd.f32 0.0, %v1083
    %v1085 = vpop.f32.mrb[0].mxu0
    %1086 = vdwg.mxu0
    %v1087 = vadd.f32 %v295, %v1084
    %v1088 = vxor.u32 %v1087, 2147483648
    %v1089 = vmul.f32 %v1088, 1.442695
    %v1090 = vpow.pop %v1089
    %v1091 = vadd.f32 %v1090, 1.0
    %v1092 = vrcp.pop %v1091
    %v1093 = vmul.f32 1.0, %v1092
    %v1094 = vmul.f32 %v1093, 2.0
    %v1095 = vsub.f32 %v1094, 1.0
    %v1096 = vmul.f32 %v1093, %v1005
    %1098 = vrot.lane.b32.xlu0 %v1095, 64
    %v1099 = vpop.permute.xlu0 %1098
    %v1101 = vmul.f32 %v1093, %v1099
    %1103 = vrot.lane.b32.xlu0 %v1101, 32
    %v1104 = vpop.permute.xlu0 %1103
    %v1106 = vadd.f32 %v1096, %v1104
    %v1107 = vtanh.pop %v1106
    %1109 = vrot.lane.b32.xlu0 %v1107, 64
    %v1110 = vpop.permute.xlu0 %1109
    %v1112 = vmul.f32 %v1093, %v1110
    %1114 = vrot.lane.b32.xlu0 %v1112, 32
    %v1115 = vpop.permute.xlu0 %1114
    %v1116 = vsel %vm161, %v1115, 0
    %1118 = vmatprep.subr.mxu0 0.0
    %1119 = vmatpush1.msra.mxu0 %v303
    %1120 = vmatprep.subr.mxu0 0.0
    %1121 = vmatpush1.msra.mxu0 %v304
    %1122 = vmatprep.subr.mxu0 0.0
    %1123 = vmatpush1.msra.mxu0 %v305
    %1124 = vmatprep.subr.mxu0 0.0
    %1125 = vmatpush1.msra.mxu0 %v306
    %1126 = vmatprep.subr.mxu0 0.0
    %1127 = vmatpush1.msra.mxu0 0.0
    %1128 = vmatprep.subr.mxu0 0.0
    %1129 = vmatpush1.msra.mxu0 0.0
    %1130 = vmatprep.subr.mxu0 0.0
    %1131 = vmatpush1.msra.mxu0 0.0
    %1132 = vmatprep.subr.mxu0 0.0
    %1133 = vmatpush1.msra.mxu0 0.0
    %1134 = vmatprep.subr.mxu0 0.0
    %1135 = vmatpush1.msra.mxu0 0.0
    %1136 = vmatprep.subr.mxu0 0.0
    %1137 = vmatpush1.msra.mxu0 0.0
    %1138 = vmatprep.subr.mxu0 0.0
    %1139 = vmatpush1.msra.mxu0 0.0
    %1140 = vmatprep.subr.mxu0 0.0
    %1141 = vmatpush1.msra.mxu0 0.0
    %1142 = vmatprep.subr.mxu0 0.0
    %1143 = vmatpush1.msra.mxu0 0.0
    %1144 = vmatprep.subr.mxu0 0.0
    %1145 = vmatpush1.msra.mxu0 0.0
    %1146 = vmatprep.subr.mxu0 0.0
    %1147 = vmatpush1.msra.mxu0 0.0
    %1148 = vmatprep.subr.mxu0 0.0
    %1149 = vmatpush1.msra.mxu0 0.0
    %1150 = vmatprep.subr.mxu0 0.0
    %1151 = vmatpush1.msra.mxu0 0.0
    %1152 = vmatprep.subr.mxu0 0.0
    %1153 = vmatpush1.msra.mxu0 0.0
    %1154 = vmatprep.subr.mxu0 0.0
    %1155 = vmatpush1.msra.mxu0 0.0
    %1156 = vmatprep.subr.mxu0 0.0
    %1157 = vmatpush1.msra.mxu0 0.0
    %1158 = vmatprep.subr.mxu0 0.0
    %1159 = vmatpush1.msra.mxu0 0.0
    %1160 = vmatprep.subr.mxu0 0.0
    %1161 = vmatpush1.msra.mxu0 0.0
    %1162 = vmatprep.subr.mxu0 0.0
    %1163 = vmatpush1.msra.mxu0 0.0
    %1164 = vmatprep.subr.mxu0 0.0
    %1165 = vmatpush1.msra.mxu0 0.0
    %1166 = vmatprep.subr.mxu0 0.0
    %1167 = vmatpush1.msra.mxu0 0.0
    %1168 = vmatprep.subr.mxu0 0.0
    %1169 = vmatpush1.msra.mxu0 0.0
    %1170 = vmatprep.subr.mxu0 0.0
    %1171 = vmatpush1.msra.mxu0 0.0
    %1172 = vmatprep.subr.mxu0 0.0
    %1173 = vmatpush1.msra.mxu0 0.0
    %1174 = vmatprep.subr.mxu0 0.0
    %1175 = vmatpush1.msra.mxu0 0.0
    %1176 = vmatprep.subr.mxu0 0.0
    %1177 = vmatpush1.msra.mxu0 0.0
    %1178 = vmatprep.subr.mxu0 0.0
    %1179 = vmatpush1.msra.mxu0 0.0
    %1180 = vmatprep.subr.mxu0 0.0
    %1181 = vmatpush1.msra.mxu0 0.0
    %1182 = vmatprep.mubr.f32.mxu0 0.0
    %1183 = vmatmul.mubr.f32.gmra.mrb[0].mxu0 %v1116
    %v1184 = vpop.f32.mrb[0].mxu0
    %v1185 = vadd.f32 0.0, %v1184
    %v1186 = vpop.f32.mrb[0].mxu0
    %1187 = vdwg.mxu0
    %v1188 = vadd.f32 %v255, %v1185
    %v1189 = vxor.u32 %v1188, 2147483648
    %v1190 = vmul.f32 %v1189, 1.442695
    %v1191 = vpow.pop %v1190
    %v1192 = vadd.f32 %v1191, 1.0
    %v1193 = vrcp.pop %v1192
    %v1194 = vmul.f32 1.0, %v1193
    %v1195 = vmul.f32 %v1194, 2.0
    %v1196 = vsub.f32 %v1195, 1.0
    %v1197 = vmul.f32 %v1194, %v1106
    %1199 = vrot.lane.b32.xlu0 %v1196, 64
    %v1200 = vpop.permute.xlu0 %1199
    %v1202 = vmul.f32 %v1194, %v1200
    %1204 = vrot.lane.b32.xlu0 %v1202, 32
    %v1205 = vpop.permute.xlu0 %1204
    %v1207 = vadd.f32 %v1197, %v1205
    %v1208 = vtanh.pop %v1207
    %1210 = vrot.lane.b32.xlu0 %v1208, 64
    %v1211 = vpop.permute.xlu0 %1210
    %v1213 = vmul.f32 %v1194, %v1211
    %1215 = vrot.lane.b32.xlu0 %v1213, 32
    %v1216 = vpop.permute.xlu0 %1215
    %v1217 = vsel %vm161, %v1216, 0
    %1219 = vmatprep.subr.mxu0 0.0
    %1220 = vmatpush1.msra.mxu0 %v303
    %1221 = vmatprep.subr.mxu0 0.0
    %1222 = vmatpush1.msra.mxu0 %v304
    %1223 = vmatprep.subr.mxu0 0.0
    %1224 = vmatpush1.msra.mxu0 %v305
    %1225 = vmatprep.subr.mxu0 0.0
    %1226 = vmatpush1.msra.mxu0 %v306
    %1227 = vmatprep.subr.mxu0 0.0
    %1228 = vmatpush1.msra.mxu0 0.0
    %1229 = vmatprep.subr.mxu0 0.0
    %1230 = vmatpush1.msra.mxu0 0.0
    %1231 = vmatprep.subr.mxu0 0.0
    %1232 = vmatpush1.msra.mxu0 0.0
    %1233 = vmatprep.subr.mxu0 0.0
    %1234 = vmatpush1.msra.mxu0 0.0
    %1235 = vmatprep.subr.mxu0 0.0
    %1236 = vmatpush1.msra.mxu0 0.0
    %1237 = vmatprep.subr.mxu0 0.0
    %1238 = vmatpush1.msra.mxu0 0.0
    %1239 = vmatprep.subr.mxu0 0.0
    %1240 = vmatpush1.msra.mxu0 0.0
    %1241 = vmatprep.subr.mxu0 0.0
    %1242 = vmatpush1.msra.mxu0 0.0
    %1243 = vmatprep.subr.mxu0 0.0
    %1244 = vmatpush1.msra.mxu0 0.0
    %1245 = vmatprep.subr.mxu0 0.0
    %1246 = vmatpush1.msra.mxu0 0.0
    %1247 = vmatprep.subr.mxu0 0.0
    %1248 = vmatpush1.msra.mxu0 0.0
    %1249 = vmatprep.subr.mxu0 0.0
    %1250 = vmatpush1.msra.mxu0 0.0
    %1251 = vmatprep.subr.mxu0 0.0
    %1252 = vmatpush1.msra.mxu0 0.0
    %1253 = vmatprep.subr.mxu0 0.0
    %1254 = vmatpush1.msra.mxu0 0.0
    %1255 = vmatprep.subr.mxu0 0.0
    %1256 = vmatpush1.msra.mxu0 0.0
    %1257 = vmatprep.subr.mxu0 0.0
    %1258 = vmatpush1.msra.mxu0 0.0
    %1259 = vmatprep.subr.mxu0 0.0
    %1260 = vmatpush1.msra.mxu0 0.0
    %1261 = vmatprep.subr.mxu0 0.0
    %1262 = vmatpush1.msra.mxu0 0.0
    %1263 = vmatprep.subr.mxu0 0.0
    %1264 = vmatpush1.msra.mxu0 0.0
    %1265 = vmatprep.subr.mxu0 0.0
    %1266 = vmatpush1.msra.mxu0 0.0
    %1267 = vmatprep.subr.mxu0 0.0
    %1268 = vmatpush1.msra.mxu0 0.0
    %1269 = vmatprep.subr.mxu0 0.0
    %1270 = vmatpush1.msra.mxu0 0.0
    %1271 = vmatprep.subr.mxu0 0.0
    %1272 = vmatpush1.msra.mxu0 0.0
    %1273 = vmatprep.subr.mxu0 0.0
    %1274 = vmatpush1.msra.mxu0 0.0
    %1275 = vmatprep.subr.mxu0 0.0
    %1276 = vmatpush1.msra.mxu0 0.0
    %1277 = vmatprep.subr.mxu0 0.0
    %1278 = vmatpush1.msra.mxu0 0.0
    %1279 = vmatprep.subr.mxu0 0.0
    %1280 = vmatpush1.msra.mxu0 0.0
    %1281 = vmatprep.subr.mxu0 0.0
    %1282 = vmatpush1.msra.mxu0 0.0
    %1283 = vmatprep.mubr.f32.mxu0 0.0
    %1284 = vmatmul.mubr.f32.gmra.mrb[0].mxu0 %v1217
    %v1285 = vpop.f32.mrb[0].mxu0
    %v1286 = vadd.f32 0.0, %v1285
    %v1287 = vpop.f32.mrb[0].mxu0
    %1288 = vdwg.mxu0
    %v1289 = vadd.f32 %v261, %v1286
    %v1290 = vxor.u32 %v1289, 2147483648
    %v1291 = vmul.f32 %v1290, 1.442695
    %v1292 = vpow.pop %v1291
    %v1293 = vadd.f32 %v1292, 1.0
    %v1294 = vrcp.pop %v1293
    %v1295 = vmul.f32 1.0, %v1294
    %v1296 = vmul.f32 %v1295, 2.0
    %v1297 = vsub.f32 %v1296, 1.0
    %v1298 = vmul.f32 %v1295, %v1207
    %1300 = vrot.lane.b32.xlu0 %v1297, 64
    %v1301 = vpop.permute.xlu0 %1300
    %v1303 = vmul.f32 %v1295, %v1301
    %1305 = vrot.lane.b32.xlu0 %v1303, 32
    %v1306 = vpop.permute.xlu0 %1305
    %v1308 = vadd.f32 %v1298, %v1306
    %v1309 = vtanh.pop %v1308
    %1311 = vrot.lane.b32.xlu0 %v1309, 64
    %v1312 = vpop.permute.xlu0 %1311
    %v1314 = vmul.f32 %v1295, %v1312
    %1316 = vrot.lane.b32.xlu0 %v1314, 32
    %v1317 = vpop.permute.xlu0 %1316
    %v1318 = vsel %vm161, %v1317, 0
    %1320 = vmatprep.subr.mxu0 0.0
    %1321 = vmatpush1.msra.mxu0 %v303
    %1322 = vmatprep.subr.mxu0 0.0
    %1323 = vmatpush1.msra.mxu0 %v304
    %1324 = vmatprep.subr.mxu0 0.0
    %1325 = vmatpush1.msra.mxu0 %v305
    %1326 = vmatprep.subr.mxu0 0.0
    %1327 = vmatpush1.msra.mxu0 %v306
    %1328 = vmatprep.subr.mxu0 0.0
    %1329 = vmatpush1.msra.mxu0 0.0
    %1330 = vmatprep.subr.mxu0 0.0
    %1331 = vmatpush1.msra.mxu0 0.0
    %1332 = vmatprep.subr.mxu0 0.0
    %1333 = vmatpush1.msra.mxu0 0.0
    %1334 = vmatprep.subr.mxu0 0.0
    %1335 = vmatpush1.msra.mxu0 0.0
    %1336 = vmatprep.subr.mxu0 0.0
    %1337 = vmatpush1.msra.mxu0 0.0
    %1338 = vmatprep.subr.mxu0 0.0
    %1339 = vmatpush1.msra.mxu0 0.0
    %1340 = vmatprep.subr.mxu0 0.0
    %1341 = vmatpush1.msra.mxu0 0.0
    %1342 = vmatprep.subr.mxu0 0.0
    %1343 = vmatpush1.msra.mxu0 0.0
    %1344 = vmatprep.subr.mxu0 0.0
    %1345 = vmatpush1.msra.mxu0 0.0
    %1346 = vmatprep.subr.mxu0 0.0
    %1347 = vmatpush1.msra.mxu0 0.0
    %1348 = vmatprep.subr.mxu0 0.0
    %1349 = vmatpush1.msra.mxu0 0.0
    %1350 = vmatprep.subr.mxu0 0.0
    %1351 = vmatpush1.msra.mxu0 0.0
    %1352 = vmatprep.subr.mxu0 0.0
    %1353 = vmatpush1.msra.mxu0 0.0
    %1354 = vmatprep.subr.mxu0 0.0
    %1355 = vmatpush1.msra.mxu0 0.0
    %1356 = vmatprep.subr.mxu0 0.0
    %1357 = vmatpush1.msra.mxu0 0.0
    %1358 = vmatprep.subr.mxu0 0.0
    %1359 = vmatpush1.msra.mxu0 0.0
    %1360 = vmatprep.subr.mxu0 0.0
    %1361 = vmatpush1.msra.mxu0 0.0
    %1362 = vmatprep.subr.mxu0 0.0
    %1363 = vmatpush1.msra.mxu0 0.0
    %1364 = vmatprep.subr.mxu0 0.0
    %1365 = vmatpush1.msra.mxu0 0.0
    %1366 = vmatprep.subr.mxu0 0.0
    %1367 = vmatpush1.msra.mxu0 0.0
    %1368 = vmatprep.subr.mxu0 0.0
    %1369 = vmatpush1.msra.mxu0 0.0
    %1370 = vmatprep.subr.mxu0 0.0
    %1371 = vmatpush1.msra.mxu0 0.0
    %1372 = vmatprep.subr.mxu0 0.0
    %1373 = vmatpush1.msra.mxu0 0.0
    %1374 = vmatprep.subr.mxu0 0.0
    %1375 = vmatpush1.msra.mxu0 0.0
    %1376 = vmatprep.subr.mxu0 0.0
    %1377 = vmatpush1.msra.mxu0 0.0
    %1378 = vmatprep.subr.mxu0 0.0
    %1379 = vmatpush1.msra.mxu0 0.0
    %1380 = vmatprep.subr.mxu0 0.0
    %1381 = vmatpush1.msra.mxu0 0.0
    %1382 = vmatprep.subr.mxu0 0.0
    %1383 = vmatpush1.msra.mxu0 0.0
    %1384 = vmatprep.mubr.f32.mxu0 0.0
    %1385 = vmatmul.mubr.f32.gmra.mrb[0].mxu0 %v1318
    %v1386 = vpop.f32.mrb[0].mxu0
    %v1387 = vadd.f32 0.0, %v1386
    %v1388 = vpop.f32.mrb[0].mxu0
    %1389 = vdwg.mxu0
    %v1390 = vadd.f32 %v267, %v1387
    %v1391 = vxor.u32 %v1390, 2147483648
    %v1392 = vmul.f32 %v1391, 1.442695
    %v1393 = vpow.pop %v1392
    %v1394 = vadd.f32 %v1393, 1.0
    %v1395 = vrcp.pop %v1394
    %v1396 = vmul.f32 1.0, %v1395
    %v1397 = vmul.f32 %v1396, 2.0
    %v1398 = vsub.f32 %v1397, 1.0
    %v1399 = vmul.f32 %v1396, %v1308
    %1401 = vrot.lane.b32.xlu0 %v1398, 64
    %v1402 = vpop.permute.xlu0 %1401
    %v1404 = vmul.f32 %v1396, %v1402
    %1406 = vrot.lane.b32.xlu0 %v1404, 32
    %v1407 = vpop.permute.xlu0 %1406
    %v1409 = vadd.f32 %v1399, %v1407
    %v1410 = vtanh.pop %v1409
    %1412 = vrot.lane.b32.xlu0 %v1410, 64
    %v1413 = vpop.permute.xlu0 %1412
    %v1415 = vmul.f32 %v1396, %v1413
    %1417 = vrot.lane.b32.xlu0 %v1415, 32
    %v1418 = vpop.permute.xlu0 %1417
    %v1419 = vsel %vm161, %v1418, 0
    %1421 = vmatprep.subr.mxu0 0.0
    %1422 = vmatpush1.msra.mxu0 %v303
    %1423 = vmatprep.subr.mxu0 0.0
    %1424 = vmatpush1.msra.mxu0 %v304
    %1425 = vmatprep.subr.mxu0 0.0
    %1426 = vmatpush1.msra.mxu0 %v305
    %1427 = vmatprep.subr.mxu0 0.0
    %1428 = vmatpush1.msra.mxu0 %v306
    %1429 = vmatprep.subr.mxu0 0.0
    %1430 = vmatpush1.msra.mxu0 0.0
    %1431 = vmatprep.subr.mxu0 0.0
    %1432 = vmatpush1.msra.mxu0 0.0
    %1433 = vmatprep.subr.mxu0 0.0
    %1434 = vmatpush1.msra.mxu0 0.0
    %1435 = vmatprep.subr.mxu0 0.0
    %1436 = vmatpush1.msra.mxu0 0.0
    %1437 = vmatprep.subr.mxu0 0.0
    %1438 = vmatpush1.msra.mxu0 0.0
    %1439 = vmatprep.subr.mxu0 0.0
    %1440 = vmatpush1.msra.mxu0 0.0
    %1441 = vmatprep.subr.mxu0 0.0
    %1442 = vmatpush1.msra.mxu0 0.0
    %1443 = vmatprep.subr.mxu0 0.0
    %1444 = vmatpush1.msra.mxu0 0.0
    %1445 = vmatprep.subr.mxu0 0.0
    %1446 = vmatpush1.msra.mxu0 0.0
    %1447 = vmatprep.subr.mxu0 0.0
    %1448 = vmatpush1.msra.mxu0 0.0
    %1449 = vmatprep.subr.mxu0 0.0
    %1450 = vmatpush1.msra.mxu0 0.0
    %1451 = vmatprep.subr.mxu0 0.0
    %1452 = vmatpush1.msra.mxu0 0.0
    %1453 = vmatprep.subr.mxu0 0.0
    %1454 = vmatpush1.msra.mxu0 0.0
    %1455 = vmatprep.subr.mxu0 0.0
    %1456 = vmatpush1.msra.mxu0 0.0
    %1457 = vmatprep.subr.mxu0 0.0
    %1458 = vmatpush1.msra.mxu0 0.0
    %1459 = vmatprep.subr.mxu0 0.0
    %1460 = vmatpush1.msra.mxu0 0.0
    %1461 = vmatprep.subr.mxu0 0.0
    %1462 = vmatpush1.msra.mxu0 0.0
    %1463 = vmatprep.subr.mxu0 0.0
    %1464 = vmatpush1.msra.mxu0 0.0
    %1465 = vmatprep.subr.mxu0 0.0
    %1466 = vmatpush1.msra.mxu0 0.0
    %1467 = vmatprep.subr.mxu0 0.0
    %1468 = vmatpush1.msra.mxu0 0.0
    %1469 = vmatprep.subr.mxu0 0.0
    %1470 = vmatpush1.msra.mxu0 0.0
    %1471 = vmatprep.subr.mxu0 0.0
    %1472 = vmatpush1.msra.mxu0 0.0
    %1473 = vmatprep.subr.mxu0 0.0
    %1474 = vmatpush1.msra.mxu0 0.0
    %1475 = vmatprep.subr.mxu0 0.0
    %1476 = vmatpush1.msra.mxu0 0.0
    %1477 = vmatprep.subr.mxu0 0.0
    %1478 = vmatpush1.msra.mxu0 0.0
    %1479 = vmatprep.subr.mxu0 0.0
    %1480 = vmatpush1.msra.mxu0 0.0
    %1481 = vmatprep.subr.mxu0 0.0
    %1482 = vmatpush1.msra.mxu0 0.0
    %1483 = vmatprep.subr.mxu0 0.0
    %1484 = vmatpush1.msra.mxu0 0.0
    %1485 = vmatprep.mubr.f32.mxu0 0.0
    %1486 = vmatmul.mubr.f32.gmra.mrb[0].mxu0 %v1419
    %v1487 = vpop.f32.mrb[0].mxu0
    %v1488 = vadd.f32 0.0, %v1487
    %v1489 = vpop.f32.mrb[0].mxu0
    %1490 = vdwg.mxu0
    %v1491 = vadd.f32 %v273, %v1488
    %v1492 = vxor.u32 %v1491, 2147483648
    %v1493 = vmul.f32 %v1492, 1.442695
    %v1494 = vpow.pop %v1493
    %v1495 = vadd.f32 %v1494, 1.0
    %v1496 = vrcp.pop %v1495
    %v1497 = vmul.f32 1.0, %v1496
    %v1498 = vmul.f32 %v1497, 2.0
    %v1499 = vsub.f32 %v1498, 1.0
    %v1500 = vmul.f32 %v1497, %v1409
    %1502 = vrot.lane.b32.xlu0 %v1499, 64
    %v1503 = vpop.permute.xlu0 %1502
    %v1505 = vmul.f32 %v1497, %v1503
    %1507 = vrot.lane.b32.xlu0 %v1505, 32
    %v1508 = vpop.permute.xlu0 %1507
    %v1510 = vadd.f32 %v1500, %v1508
    %v1511 = vtanh.pop %v1510
    %1513 = vrot.lane.b32.xlu0 %v1511, 64
    %v1514 = vpop.permute.xlu0 %1513
    %v1516 = vmul.f32 %v1497, %v1514
    %1518 = vrot.lane.b32.xlu0 %v1516, 32
    %v1519 = vpop.permute.xlu0 %1518
    %v1520 = vsel %vm161, %v1519, 0
    %1522 = vmatprep.subr.mxu0 0.0
    %1523 = vmatpush1.msra.mxu0 %v303
    %1524 = vmatprep.subr.mxu0 0.0
    %1525 = vmatpush1.msra.mxu0 %v304
    %1526 = vmatprep.subr.mxu0 0.0
    %1527 = vmatpush1.msra.mxu0 %v305
    %1528 = vmatprep.subr.mxu0 0.0
    %1529 = vmatpush1.msra.mxu0 %v306
    %1530 = vmatprep.subr.mxu0 0.0
    %1531 = vmatpush1.msra.mxu0 0.0
    %1532 = vmatprep.subr.mxu0 0.0
    %1533 = vmatpush1.msra.mxu0 0.0
    %1534 = vmatprep.subr.mxu0 0.0
    %1535 = vmatpush1.msra.mxu0 0.0
    %1536 = vmatprep.subr.mxu0 0.0
    %1537 = vmatpush1.msra.mxu0 0.0
    %1538 = vmatprep.subr.mxu0 0.0
    %1539 = vmatpush1.msra.mxu0 0.0
    %1540 = vmatprep.subr.mxu0 0.0
    %1541 = vmatpush1.msra.mxu0 0.0
    %1542 = vmatprep.subr.mxu0 0.0
    %1543 = vmatpush1.msra.mxu0 0.0
    %1544 = vmatprep.subr.mxu0 0.0
    %1545 = vmatpush1.msra.mxu0 0.0
    %1546 = vmatprep.subr.mxu0 0.0
    %1547 = vmatpush1.msra.mxu0 0.0
    %1548 = vmatprep.subr.mxu0 0.0
    %1549 = vmatpush1.msra.mxu0 0.0
    %1550 = vmatprep.subr.mxu0 0.0
    %1551 = vmatpush1.msra.mxu0 0.0
    %1552 = vmatprep.subr.mxu0 0.0
    %1553 = vmatpush1.msra.mxu0 0.0
    %1554 = vmatprep.subr.mxu0 0.0
    %1555 = vmatpush1.msra.mxu0 0.0
    %1556 = vmatprep.subr.mxu0 0.0
    %1557 = vmatpush1.msra.mxu0 0.0
    %1558 = vmatprep.subr.mxu0 0.0
    %1559 = vmatpush1.msra.mxu0 0.0
    %1560 = vmatprep.subr.mxu0 0.0
    %1561 = vmatpush1.msra.mxu0 0.0
    %1562 = vmatprep.subr.mxu0 0.0
    %1563 = vmatpush1.msra.mxu0 0.0
    %1564 = vmatprep.subr.mxu0 0.0
    %1565 = vmatpush1.msra.mxu0 0.0
    %1566 = vmatprep.subr.mxu0 0.0
    %1567 = vmatpush1.msra.mxu0 0.0
    %1568 = vmatprep.subr.mxu0 0.0
    %1569 = vmatpush1.msra.mxu0 0.0
    %1570 = vmatprep.subr.mxu0 0.0
    %1571 = vmatpush1.msra.mxu0 0.0
    %1572 = vmatprep.subr.mxu0 0.0
    %1573 = vmatpush1.msra.mxu0 0.0
    %1574 = vmatprep.subr.mxu0 0.0
    %1575 = vmatpush1.msra.mxu0 0.0
    %1576 = vmatprep.subr.mxu0 0.0
    %1577 = vmatpush1.msra.mxu0 0.0
    %1578 = vmatprep.subr.mxu0 0.0
    %1579 = vmatpush1.msra.mxu0 0.0
    %1580 = vmatprep.subr.mxu0 0.0
    %1581 = vmatpush1.msra.mxu0 0.0
    %1582 = vmatprep.subr.mxu0 0.0
    %1583 = vmatpush1.msra.mxu0 0.0
    %1584 = vmatprep.subr.mxu0 0.0
    %1585 = vmatpush1.msra.mxu0 0.0
    %1586 = vmatprep.mubr.f32.mxu0 0.0
    %1587 = vmatmul.mubr.f32.gmra.mrb[0].mxu0 %v1520
    %v1588 = vpop.f32.mrb[0].mxu0
    %v1589 = vadd.f32 0.0, %v1588
    %v1590 = vpop.f32.mrb[0].mxu0
    %1591 = vdwg.mxu0
    %v1592 = vadd.f32 %v279, %v1589
    %v1593 = vxor.u32 %v1592, 2147483648
    %v1594 = vmul.f32 %v1593, 1.442695
    %v1595 = vpow.pop %v1594
    %v1596 = vadd.f32 %v1595, 1.0
    %v1597 = vrcp.pop %v1596
    %v1598 = vmul.f32 1.0, %v1597
    %v1599 = vmul.f32 %v1598, 2.0
    %v1600 = vsub.f32 %v1599, 1.0
    %v1601 = vmul.f32 %v1598, %v1510
    %1603 = vrot.lane.b32.xlu0 %v1600, 64
    %v1604 = vpop.permute.xlu0 %1603
    %v1606 = vmul.f32 %v1598, %v1604
    %1608 = vrot.lane.b32.xlu0 %v1606, 32
    %v1609 = vpop.permute.xlu0 %1608
    %v1611 = vadd.f32 %v1601, %v1609
    %v1612 = vtanh.pop %v1611
    %1614 = vrot.lane.b32.xlu0 %v1612, 64
    %v1615 = vpop.permute.xlu0 %1614
    %v1617 = vmul.f32 %v1598, %v1615
    %1619 = vrot.lane.b32.xlu0 %v1617, 32
    %v1620 = vpop.permute.xlu0 %1619
    %v1621 = vsel %vm161, %v1620, 0
    %1623 = vmatprep.subr.mxu0 0.0
    %1624 = vmatpush1.msra.mxu0 %v303
    %1625 = vmatprep.subr.mxu0 0.0
    %1626 = vmatpush1.msra.mxu0 %v304
    %1627 = vmatprep.subr.mxu0 0.0
    %1628 = vmatpush1.msra.mxu0 %v305
    %1629 = vmatprep.subr.mxu0 0.0
    %1630 = vmatpush1.msra.mxu0 %v306
    %1631 = vmatprep.subr.mxu0 0.0
    %1632 = vmatpush1.msra.mxu0 0.0
    %1633 = vmatprep.subr.mxu0 0.0
    %1634 = vmatpush1.msra.mxu0 0.0
    %1635 = vmatprep.subr.mxu0 0.0
    %1636 = vmatpush1.msra.mxu0 0.0
    %1637 = vmatprep.subr.mxu0 0.0
    %1638 = vmatpush1.msra.mxu0 0.0
    %1639 = vmatprep.subr.mxu0 0.0
    %1640 = vmatpush1.msra.mxu0 0.0
    %1641 = vmatprep.subr.mxu0 0.0
    %1642 = vmatpush1.msra.mxu0 0.0
    %1643 = vmatprep.subr.mxu0 0.0
    %1644 = vmatpush1.msra.mxu0 0.0
    %1645 = vmatprep.subr.mxu0 0.0
    %1646 = vmatpush1.msra.mxu0 0.0
    %1647 = vmatprep.subr.mxu0 0.0
    %1648 = vmatpush1.msra.mxu0 0.0
    %1649 = vmatprep.subr.mxu0 0.0
    %1650 = vmatpush1.msra.mxu0 0.0
    %1651 = vmatprep.subr.mxu0 0.0
    %1652 = vmatpush1.msra.mxu0 0.0
    %1653 = vmatprep.subr.mxu0 0.0
    %1654 = vmatpush1.msra.mxu0 0.0
    %1655 = vmatprep.subr.mxu0 0.0
    %1656 = vmatpush1.msra.mxu0 0.0
    %1657 = vmatprep.subr.mxu0 0.0
    %1658 = vmatpush1.msra.mxu0 0.0
    %1659 = vmatprep.subr.mxu0 0.0
    %1660 = vmatpush1.msra.mxu0 0.0
    %1661 = vmatprep.subr.mxu0 0.0
    %1662 = vmatpush1.msra.mxu0 0.0
    %1663 = vmatprep.subr.mxu0 0.0
    %1664 = vmatpush1.msra.mxu0 0.0
    %1665 = vmatprep.subr.mxu0 0.0
    %1666 = vmatpush1.msra.mxu0 0.0
    %1667 = vmatprep.subr.mxu0 0.0
    %1668 = vmatpush1.msra.mxu0 0.0
    %1669 = vmatprep.subr.mxu0 0.0
    %1670 = vmatpush1.msra.mxu0 0.0
    %1671 = vmatprep.subr.mxu0 0.0
    %1672 = vmatpush1.msra.mxu0 0.0
    %1673 = vmatprep.subr.mxu0 0.0
    %1674 = vmatpush1.msra.mxu0 0.0
    %1675 = vmatprep.subr.mxu0 0.0
    %1676 = vmatpush1.msra.mxu0 0.0
    %1677 = vmatprep.subr.mxu0 0.0
    %1678 = vmatpush1.msra.mxu0 0.0
    %1679 = vmatprep.subr.mxu0 0.0
    %1680 = vmatpush1.msra.mxu0 0.0
    %1681 = vmatprep.subr.mxu0 0.0
    %1682 = vmatpush1.msra.mxu0 0.0
    %1683 = vmatprep.subr.mxu0 0.0
    %1684 = vmatpush1.msra.mxu0 0.0
    %1685 = vmatprep.subr.mxu0 0.0
    %1686 = vmatpush1.msra.mxu0 0.0
    %1687 = vmatprep.mubr.f32.mxu0 0.0
    %1688 = vmatmul.mubr.f32.gmra.mrb[0].mxu0 %v1621
    %v1689 = vpop.f32.mrb[0].mxu0
    %v1690 = vadd.f32 0.0, %v1689
    %v1691 = vpop.f32.mrb[0].mxu0
    %1692 = vdwg.mxu0
    %v1693 = vadd.f32 %v285, %v1690
    %v1694 = vxor.u32 %v1693, 2147483648
    %v1695 = vmul.f32 %v1694, 1.442695
    %v1696 = vpow.pop %v1695
    %v1697 = vadd.f32 %v1696, 1.0
    %v1698 = vrcp.pop %v1697
    %v1699 = vmul.f32 1.0, %v1698
    %v1700 = vmul.f32 %v1699, 2.0
    %v1701 = vsub.f32 %v1700, 1.0
    %v1702 = vmul.f32 %v1699, %v1611
    %1704 = vrot.lane.b32.xlu0 %v1701, 64
    %v1705 = vpop.permute.xlu0 %1704
    %v1707 = vmul.f32 %v1699, %v1705
    %1709 = vrot.lane.b32.xlu0 %v1707, 32
    %v1710 = vpop.permute.xlu0 %1709
    %v1712 = vadd.f32 %v1702, %v1710
    %v1713 = vtanh.pop %v1712
    %1715 = vrot.lane.b32.xlu0 %v1713, 64
    %v1716 = vpop.permute.xlu0 %1715
    %v1718 = vmul.f32 %v1699, %v1716
    %1720 = vrot.lane.b32.xlu0 %v1718, 32
    %v1721 = vpop.permute.xlu0 %1720
    %v1722 = vsel %vm161, %v1721, 0
    %1724 = vmatprep.subr.mxu0 0.0
    %1725 = vmatpush1.msra.mxu0 %v303
    %1726 = vmatprep.subr.mxu0 0.0
    %1727 = vmatpush1.msra.mxu0 %v304
    %1728 = vmatprep.subr.mxu0 0.0
    %1729 = vmatpush1.msra.mxu0 %v305
    %1730 = vmatprep.subr.mxu0 0.0
    %1731 = vmatpush1.msra.mxu0 %v306
    %1732 = vmatprep.subr.mxu0 0.0
    %1733 = vmatpush1.msra.mxu0 0.0
    %1734 = vmatprep.subr.mxu0 0.0
    %1735 = vmatpush1.msra.mxu0 0.0
    %1736 = vmatprep.subr.mxu0 0.0
    %1737 = vmatpush1.msra.mxu0 0.0
    %1738 = vmatprep.subr.mxu0 0.0
    %1739 = vmatpush1.msra.mxu0 0.0
    %1740 = vmatprep.subr.mxu0 0.0
    %1741 = vmatpush1.msra.mxu0 0.0
    %1742 = vmatprep.subr.mxu0 0.0
    %1743 = vmatpush1.msra.mxu0 0.0
    %1744 = vmatprep.subr.mxu0 0.0
    %1745 = vmatpush1.msra.mxu0 0.0
    %1746 = vmatprep.subr.mxu0 0.0
    %1747 = vmatpush1.msra.mxu0 0.0
    %1748 = vmatprep.subr.mxu0 0.0
    %1749 = vmatpush1.msra.mxu0 0.0
    %1750 = vmatprep.subr.mxu0 0.0
    %1751 = vmatpush1.msra.mxu0 0.0
    %1752 = vmatprep.subr.mxu0 0.0
    %1753 = vmatpush1.msra.mxu0 0.0
    %1754 = vmatprep.subr.mxu0 0.0
    %1755 = vmatpush1.msra.mxu0 0.0
    %1756 = vmatprep.subr.mxu0 0.0
    %1757 = vmatpush1.msra.mxu0 0.0
    %1758 = vmatprep.subr.mxu0 0.0
    %1759 = vmatpush1.msra.mxu0 0.0
    %1760 = vmatprep.subr.mxu0 0.0
    %1761 = vmatpush1.msra.mxu0 0.0
    %1762 = vmatprep.subr.mxu0 0.0
    %1763 = vmatpush1.msra.mxu0 0.0
    %1764 = vmatprep.subr.mxu0 0.0
    %1765 = vmatpush1.msra.mxu0 0.0
    %1766 = vmatprep.subr.mxu0 0.0
    %1767 = vmatpush1.msra.mxu0 0.0
    %1768 = vmatprep.subr.mxu0 0.0
    %1769 = vmatpush1.msra.mxu0 0.0
    %1770 = vmatprep.subr.mxu0 0.0
    %1771 = vmatpush1.msra.mxu0 0.0
    %1772 = vmatprep.subr.mxu0 0.0
    %1773 = vmatpush1.msra.mxu0 0.0
    %1774 = vmatprep.subr.mxu0 0.0
    %1775 = vmatpush1.msra.mxu0 0.0
    %1776 = vmatprep.subr.mxu0 0.0
    %1777 = vmatpush1.msra.mxu0 0.0
    %1778 = vmatprep.subr.mxu0 0.0
    %1779 = vmatpush1.msra.mxu0 0.0
    %1780 = vmatprep.subr.mxu0 0.0
    %1781 = vmatpush1.msra.mxu0 0.0
    %1782 = vmatprep.subr.mxu0 0.0
    %1783 = vmatpush1.msra.mxu0 0.0
    %1784 = vmatprep.subr.mxu0 0.0
    %1785 = vmatpush1.msra.mxu0 0.0
    %1786 = vmatprep.subr.mxu0 0.0
    %1787 = vmatpush1.msra.mxu0 0.0
    %1788 = vmatprep.mubr.f32.mxu0 0.0
    %1789 = vmatmul.mubr.f32.gmra.mrb[0].mxu0 %v1722
    %v1790 = vpop.f32.mrb[0].mxu0
    %v1791 = vadd.f32 0.0, %v1790
    %v1792 = vpop.f32.mrb[0].mxu0
    %1793 = vdwg.mxu0
    %v1794 = vadd.f32 %v291, %v1791
    %v1795 = vxor.u32 %v1794, 2147483648
    %v1796 = vmul.f32 %v1795, 1.442695
    %v1797 = vpow.pop %v1796
    %v1798 = vadd.f32 %v1797, 1.0
    %v1799 = vrcp.pop %v1798
    %v1800 = vmul.f32 1.0, %v1799
    %v1801 = vmul.f32 %v1800, 2.0
    %v1802 = vsub.f32 %v1801, 1.0
    %v1803 = vmul.f32 %v1800, %v1712
    %1805 = vrot.lane.b32.xlu0 %v1802, 64
    %v1806 = vpop.permute.xlu0 %1805
    %v1808 = vmul.f32 %v1800, %v1806
    %1810 = vrot.lane.b32.xlu0 %v1808, 32
    %v1811 = vpop.permute.xlu0 %1810
    %v1813 = vadd.f32 %v1803, %v1811
    %v1814 = vtanh.pop %v1813
    %1816 = vrot.lane.b32.xlu0 %v1814, 64
    %v1817 = vpop.permute.xlu0 %1816
    %v1819 = vmul.f32 %v1800, %v1817
    %1821 = vrot.lane.b32.xlu0 %v1819, 32
    %v1822 = vpop.permute.xlu0 %1821
    %v1823 = vsel %vm161, %v1822, 0
    %1825 = vmatprep.subr.mxu0 0.0
    %1826 = vmatpush1.msra.mxu0 %v303
    %1827 = vmatprep.subr.mxu0 0.0
    %1828 = vmatpush1.msra.mxu0 %v304
    %1829 = vmatprep.subr.mxu0 0.0
    %1830 = vmatpush1.msra.mxu0 %v305
    %1831 = vmatprep.subr.mxu0 0.0
    %1832 = vmatpush1.msra.mxu0 %v306
    %1833 = vmatprep.subr.mxu0 0.0
    %1834 = vmatpush1.msra.mxu0 0.0
    %1835 = vmatprep.subr.mxu0 0.0
    %1836 = vmatpush1.msra.mxu0 0.0
    %1837 = vmatprep.subr.mxu0 0.0
    %1838 = vmatpush1.msra.mxu0 0.0
    %1839 = vmatprep.subr.mxu0 0.0
    %1840 = vmatpush1.msra.mxu0 0.0
    %1841 = vmatprep.subr.mxu0 0.0
    %1842 = vmatpush1.msra.mxu0 0.0
    %1843 = vmatprep.subr.mxu0 0.0
    %1844 = vmatpush1.msra.mxu0 0.0
    %1845 = vmatprep.subr.mxu0 0.0
    %1846 = vmatpush1.msra.mxu0 0.0
    %1847 = vmatprep.subr.mxu0 0.0
    %1848 = vmatpush1.msra.mxu0 0.0
    %1849 = vmatprep.subr.mxu0 0.0
    %1850 = vmatpush1.msra.mxu0 0.0
    %1851 = vmatprep.subr.mxu0 0.0
    %1852 = vmatpush1.msra.mxu0 0.0
    %1853 = vmatprep.subr.mxu0 0.0
    %1854 = vmatpush1.msra.mxu0 0.0
    %1855 = vmatprep.subr.mxu0 0.0
    %1856 = vmatpush1.msra.mxu0 0.0
    %1857 = vmatprep.subr.mxu0 0.0
    %1858 = vmatpush1.msra.mxu0 0.0
    %1859 = vmatprep.subr.mxu0 0.0
    %1860 = vmatpush1.msra.mxu0 0.0
    %1861 = vmatprep.subr.mxu0 0.0
    %1862 = vmatpush1.msra.mxu0 0.0
    %1863 = vmatprep.subr.mxu0 0.0
    %1864 = vmatpush1.msra.mxu0 0.0
    %1865 = vmatprep.subr.mxu0 0.0
    %1866 = vmatpush1.msra.mxu0 0.0
    %1867 = vmatprep.subr.mxu0 0.0
    %1868 = vmatpush1.msra.mxu0 0.0
    %1869 = vmatprep.subr.mxu0 0.0
    %1870 = vmatpush1.msra.mxu0 0.0
    %1871 = vmatprep.subr.mxu0 0.0
    %1872 = vmatpush1.msra.mxu0 0.0
    %1873 = vmatprep.subr.mxu0 0.0
    %1874 = vmatpush1.msra.mxu0 0.0
    %1875 = vmatprep.subr.mxu0 0.0
    %1876 = vmatpush1.msra.mxu0 0.0
    %1877 = vmatprep.subr.mxu0 0.0
    %1878 = vmatpush1.msra.mxu0 0.0
    %1879 = vmatprep.subr.mxu0 0.0
    %1880 = vmatpush1.msra.mxu0 0.0
    %1881 = vmatprep.subr.mxu0 0.0
    %1882 = vmatpush1.msra.mxu0 0.0
    %1883 = vmatprep.subr.mxu0 0.0
    %1884 = vmatpush1.msra.mxu0 0.0
    %1885 = vmatprep.subr.mxu0 0.0
    %1886 = vmatpush1.msra.mxu0 0.0
    %1887 = vmatprep.subr.mxu0 0.0
    %1888 = vmatpush1.msra.mxu0 0.0
    %1889 = vmatprep.mubr.f32.mxu0 0.0
    %1890 = vmatmul.mubr.f32.gmra.mrb[0].mxu0 %v1823
    %v1891 = vpop.f32.mrb[0].mxu0
    %v1892 = vadd.f32 0.0, %v1891
    %v1893 = vpop.f32.mrb[0].mxu0
    %1894 = vdwg.mxu0
    %v1895 = vadd.f32 %v297, %v1892
    %v1896 = vxor.u32 %v1895, 2147483648
    %v1897 = vmul.f32 %v1896, 1.442695
    %v1898 = vpow.pop %v1897
    %v1899 = vadd.f32 %v1898, 1.0
    %v1900 = vrcp.pop %v1899
    %v1901 = vmul.f32 1.0, %v1900
    %v1902 = vmul.f32 %v1901, 2.0
    %v1903 = vsub.f32 %v1902, 1.0
    %v1904 = vmul.f32 %v1901, %v1813
    %1906 = vrot.lane.b32.xlu0 %v1903, 64
    %v1907 = vpop.permute.xlu0 %1906
    %v1909 = vmul.f32 %v1901, %v1907
    %1911 = vrot.lane.b32.xlu0 %v1909, 32
    %v1912 = vpop.permute.xlu0 %1911
    %v1914 = vadd.f32 %v1904, %v1912
    %v1915 = vtanh.pop %v1914
    %1917 = vrot.lane.b32.xlu0 %v1915, 64
    %v1918 = vpop.permute.xlu0 %1917
    %v1920 = vmul.f32 %v1901, %v1918
    %v1921 = vld [vmem:[%s2 + $0x90] sm:$0xff]
    %v1922 = vld [vmem:[%s2 + $0xa0] sm:$0xff]
    %v1923 = vld [vmem:[%s2 + $0xb0] sm:$0xff]
    %v1924 = vld [vmem:[%s2 + $0xc0] sm:$0xff]
    %v1925 = vld [vmem:[%s2 + $0x84] ss:$0 sm:$0xff]
    %1927 = vrot.lane.b32.xlu0 %v1920, 32
    %v1928 = vpop.permute.xlu0 %1927
    %v1929 = vsel %vm161, %v1928, 0
    %1931 = vmatprep.subr.mxu0 0.0
    %1932 = vmatpush1.msra.mxu0 %v1921
    %1933 = vmatprep.subr.mxu0 0.0
    %1934 = vmatpush1.msra.mxu0 %v1922
    %1935 = vmatprep.subr.mxu0 0.0
    %1936 = vmatpush1.msra.mxu0 %v1923
    %1937 = vmatprep.subr.mxu0 0.0
    %1938 = vmatpush1.msra.mxu0 %v1924
    %1939 = vmatprep.subr.mxu0 0.0
    %1940 = vmatpush1.msra.mxu0 0.0
    %1941 = vmatprep.subr.mxu0 0.0
    %1942 = vmatpush1.msra.mxu0 0.0
    %1943 = vmatprep.subr.mxu0 0.0
    %1944 = vmatpush1.msra.mxu0 0.0
    %1945 = vmatprep.subr.mxu0 0.0
    %1946 = vmatpush1.msra.mxu0 0.0
    %1947 = vmatprep.subr.mxu0 0.0
    %1948 = vmatpush1.msra.mxu0 0.0
    %1949 = vmatprep.subr.mxu0 0.0
    %1950 = vmatpush1.msra.mxu0 0.0
    %1951 = vmatprep.subr.mxu0 0.0
    %1952 = vmatpush1.msra.mxu0 0.0
    %1953 = vmatprep.subr.mxu0 0.0
    %1954 = vmatpush1.msra.mxu0 0.0
    %1955 = vmatprep.subr.mxu0 0.0
    %1956 = vmatpush1.msra.mxu0 0.0
    %1957 = vmatprep.subr.mxu0 0.0
    %1958 = vmatpush1.msra.mxu0 0.0
    %1959 = vmatprep.subr.mxu0 0.0
    %1960 = vmatpush1.msra.mxu0 0.0
    %1961 = vmatprep.subr.mxu0 0.0
    %1962 = vmatpush1.msra.mxu0 0.0
    %1963 = vmatprep.subr.mxu0 0.0
    %1964 = vmatpush1.msra.mxu0 0.0
    %1965 = vmatprep.subr.mxu0 0.0
    %1966 = vmatpush1.msra.mxu0 0.0
    %1967 = vmatprep.subr.mxu0 0.0
    %1968 = vmatpush1.msra.mxu0 0.0
    %1969 = vmatprep.subr.mxu0 0.0
    %1970 = vmatpush1.msra.mxu0 0.0
    %1971 = vmatprep.subr.mxu0 0.0
    %1972 = vmatpush1.msra.mxu0 0.0
    %1973 = vmatprep.subr.mxu0 0.0
    %1974 = vmatpush1.msra.mxu0 0.0
    %1975 = vmatprep.subr.mxu0 0.0
    %1976 = vmatpush1.msra.mxu0 0.0
    %1977 = vmatprep.subr.mxu0 0.0
    %1978 = vmatpush1.msra.mxu0 0.0
    %1979 = vmatprep.subr.mxu0 0.0
    %1980 = vmatpush1.msra.mxu0 0.0
    %1981 = vmatprep.subr.mxu0 0.0
    %1982 = vmatpush1.msra.mxu0 0.0
    %1983 = vmatprep.subr.mxu0 0.0
    %1984 = vmatpush1.msra.mxu0 0.0
    %1985 = vmatprep.subr.mxu0 0.0
    %1986 = vmatpush1.msra.mxu0 0.0
    %1987 = vmatprep.subr.mxu0 0.0
    %1988 = vmatpush1.msra.mxu0 0.0
    %1989 = vmatprep.subr.mxu0 0.0
    %1990 = vmatpush1.msra.mxu0 0.0
    %1991 = vmatprep.subr.mxu0 0.0
    %1992 = vmatpush1.msra.mxu0 0.0
    %1993 = vmatprep.subr.mxu0 0.0
    %1994 = vmatpush1.msra.mxu0 0.0
    %1995 = vmatprep.mubr.f32.mxu0 0.0
    %1996 = vmatmul.mubr.f32.gmra.mrb[0].mxu0 %v1217
    %v1997 = vpop.f32.mrb[0].mxu0
    %v1998 = vadd.f32 %v1925, %v1997
    %v1999 = vpop.f32.mrb[0].mxu0
    %2000 = vmatprep.mubr.f32.mxu0 0.0
    %2001 = vmatmul.mubr.f32.gmra.mrb[0].mxu0 %v1318
    %v2002 = vpop.f32.mrb[0].mxu0
    %v2003 = vadd.f32 %v1925, %v2002
    %v2004 = vpop.f32.mrb[0].mxu0
    %2005 = vmatprep.mubr.f32.mxu0 0.0
    %2006 = vmatmul.mubr.f32.gmra.mrb[0].mxu0 %v1419
    %v2007 = vpop.f32.mrb[0].mxu0
    %v2008 = vadd.f32 %v1925, %v2007
    %v2009 = vpop.f32.mrb[0].mxu0
    %2010 = vmatprep.mubr.f32.mxu0 0.0
    %2011 = vmatmul.mubr.f32.gmra.mrb[0].mxu0 %v1520
    %v2012 = vpop.f32.mrb[0].mxu0
    %v2013 = vadd.f32 %v1925, %v2012
    %v2014 = vpop.f32.mrb[0].mxu0
    %2015 = vmatprep.mubr.f32.mxu0 0.0
    %2016 = vmatmul.mubr.f32.gmra.mrb[0].mxu0 %v1621
    %v2017 = vpop.f32.mrb[0].mxu0
    %v2018 = vadd.f32 %v1925, %v2017
    %v2019 = vpop.f32.mrb[0].mxu0
    %2020 = vmatprep.mubr.f32.mxu0 0.0
    %2021 = vmatmul.mubr.f32.gmra.mrb[0].mxu0 %v1722
    %v2022 = vpop.f32.mrb[0].mxu0
    %v2023 = vadd.f32 %v1925, %v2022
    %v2024 = vpop.f32.mrb[0].mxu0
    %2025 = vmatprep.mubr.f32.mxu0 0.0
    %2026 = vmatmul.mubr.f32.gmra.mrb[0].mxu0 %v1823
    %v2027 = vpop.f32.mrb[0].mxu0
    %v2028 = vadd.f32 %v1925, %v2027
    %v2029 = vpop.f32.mrb[0].mxu0
    %2030 = vmatprep.mubr.f32.mxu0 0.0
    %2031 = vmatmul.mubr.f32.gmra.mrb[0].mxu0 %v1929
    %v2032 = vpop.f32.mrb[0].mxu0
    %v2033 = vadd.f32 %v1925, %v2032
    %v2034 = vpop.f32.mrb[0].mxu0
    %2035 = vdwg.mxu0
    %vm2036 = vcmask 15360
    %2037 = vst.msk [vmem:[%s3] sm:$0xff] %vm2036, %v1998
    %2038 = vst.msk [vmem:[%s3 + $0x8] sm:$0xff] %vm2036, %v2003
    %2039 = vst.msk [vmem:[%s3 + $0x10] sm:$0xff] %vm2036, %v2008
    %2040 = vst.msk [vmem:[%s3 + $0x18] sm:$0xff] %vm2036, %v2013
    %2041 = vst.msk [vmem:[%s3 + $0x20] sm:$0xff] %vm2036, %v2018
    %2042 = vst.msk [vmem:[%s3 + $0x28] sm:$0xff] %vm2036, %v2023
    %2043 = vst.msk [vmem:[%s3 + $0x30] sm:$0xff] %vm2036, %v2028
    %2044 = vst.msk [vmem:[%s3 + $0x38] sm:$0xff] %vm2036, %v2033
    %v2045 = vld [vmem:[%s1] sm:$0xff]
    %v2046 = vld [vmem:[%s1 + $0x8] sm:$0xff]
    %v2047 = vld [vmem:[%s1 + $0x10] sm:$0xff]
    %v2048 = vld [vmem:[%s1 + $0x18] sm:$0xff]
    %v2049 = vld [vmem:[%s1 + $0x20] sm:$0xff]
    %v2050 = vld [vmem:[%s1 + $0x28] sm:$0xff]
    %v2051 = vld [vmem:[%s1 + $0x30] sm:$0xff]
    %v2052 = vld [vmem:[%s1 + $0x38] sm:$0xff]
    %v2053 = vsub.f32 %v1998, %v2045
    %v2054 = vsub.f32 %v2003, %v2046
    %v2055 = vsub.f32 %v2008, %v2047
    %v2056 = vsub.f32 %v2013, %v2048
    %v2057 = vsub.f32 %v2018, %v2049
    %v2058 = vsub.f32 %v2023, %v2050
    %v2059 = vsub.f32 %v2028, %v2051
    %v2060 = vsub.f32 %v2033, %v2052
    %v2061 = vmul.f32 %v2053, %v2053
    %v2062 = vmul.f32 %v2054, %v2054
    %v2063 = vmul.f32 %v2055, %v2055
    %v2064 = vmul.f32 %v2056, %v2056
    %v2065 = vmul.f32 %v2057, %v2057
    %v2066 = vmul.f32 %v2058, %v2058
    %v2067 = vmul.f32 %v2059, %v2059
    %v2068 = vmul.f32 %v2060, %v2060
    %v2069 = vsel %vm2036, %v2061, 0.0
    %2070 = vadd.xlane.f32.xlu0 %v2069
    %v2071 = vpop.xlane.xlu0 %2070
    %v2072 = vsel %vm2036, %v2062, 0.0
    %2073 = vadd.xlane.f32.xlu0 %v2072
    %v2074 = vpop.xlane.xlu0 %2073
    %v2075 = vsel %vm2036, %v2063, 0.0
    %2076 = vadd.xlane.f32.xlu0 %v2075
    %v2077 = vpop.xlane.xlu0 %2076
    %v2078 = vsel %vm2036, %v2064, 0.0
    %2079 = vadd.xlane.f32.xlu0 %v2078
    %v2080 = vpop.xlane.xlu0 %2079
    %v2081 = vsel %vm2036, %v2065, 0.0
    %2082 = vadd.xlane.f32.xlu0 %v2081
    %v2083 = vpop.xlane.xlu0 %2082
    %v2084 = vsel %vm2036, %v2066, 0.0
    %2085 = vadd.xlane.f32.xlu0 %v2084
    %v2086 = vpop.xlane.xlu0 %2085
    %v2087 = vsel %vm2036, %v2067, 0.0
    %2088 = vadd.xlane.f32.xlu0 %v2087
    %v2089 = vpop.xlane.xlu0 %2088
    %v2090 = vsel %vm2036, %v2068, 0.0
    %2091 = vadd.xlane.f32.xlu0 %v2090
    %v2092 = vpop.xlane.xlu0 %2091
    %v2093 = vrsqrt.pop %v2071
    %v2094 = vmul.f32 %v2071, %v2093
    %vm2095 = vcmp.eq.f32.partialorder %v2071, inf
    %v2096 = vsel %vm2095, %v2071, %v2094
    %vm2097 = vcmp.eq.f32.partialorder %v2071, 0.0
    %v2098 = vand.u32 %v2071, 2147483648
    %v2099 = vsel %vm2097, %v2098, %v2096
    %v2100 = vrsqrt.pop %v2074
    %v2101 = vmul.f32 %v2074, %v2100
    %vm2102 = vcmp.eq.f32.partialorder %v2074, inf
    %v2103 = vsel %vm2102, %v2074, %v2101
    %vm2104 = vcmp.eq.f32.partialorder %v2074, 0.0
    %v2105 = vand.u32 %v2074, 2147483648
    %v2106 = vsel %vm2104, %v2105, %v2103
    %v2107 = vrsqrt.pop %v2077
    %v2108 = vmul.f32 %v2077, %v2107
    %vm2109 = vcmp.eq.f32.partialorder %v2077, inf
    %v2110 = vsel %vm2109, %v2077, %v2108
    %vm2111 = vcmp.eq.f32.partialorder %v2077, 0.0
    %v2112 = vand.u32 %v2077, 2147483648
    %v2113 = vsel %vm2111, %v2112, %v2110
    %v2114 = vrsqrt.pop %v2080
    %v2115 = vmul.f32 %v2080, %v2114
    %vm2116 = vcmp.eq.f32.partialorder %v2080, inf
    %v2117 = vsel %vm2116, %v2080, %v2115
    %vm2118 = vcmp.eq.f32.partialorder %v2080, 0.0
    %v2119 = vand.u32 %v2080, 2147483648
    %v2120 = vsel %vm2118, %v2119, %v2117
    %v2121 = vrsqrt.pop %v2083
    %v2122 = vmul.f32 %v2083, %v2121
    %vm2123 = vcmp.eq.f32.partialorder %v2083, inf
    %v2124 = vsel %vm2123, %v2083, %v2122
    %vm2125 = vcmp.eq.f32.partialorder %v2083, 0.0
    %v2126 = vand.u32 %v2083, 2147483648
    %v2127 = vsel %vm2125, %v2126, %v2124
    %v2128 = vrsqrt.pop %v2086
    %v2129 = vmul.f32 %v2086, %v2128
    %vm2130 = vcmp.eq.f32.partialorder %v2086, inf
    %v2131 = vsel %vm2130, %v2086, %v2129
    %vm2132 = vcmp.eq.f32.partialorder %v2086, 0.0
    %v2133 = vand.u32 %v2086, 2147483648
    %v2134 = vsel %vm2132, %v2133, %v2131
    %v2135 = vrsqrt.pop %v2089
    %v2136 = vmul.f32 %v2089, %v2135
    %vm2137 = vcmp.eq.f32.partialorder %v2089, inf
    %v2138 = vsel %vm2137, %v2089, %v2136
    %vm2139 = vcmp.eq.f32.partialorder %v2089, 0.0
    %v2140 = vand.u32 %v2089, 2147483648
    %v2141 = vsel %vm2139, %v2140, %v2138
    %v2142 = vrsqrt.pop %v2092
    %v2143 = vmul.f32 %v2092, %v2142
    %vm2144 = vcmp.eq.f32.partialorder %v2092, inf
    %v2145 = vsel %vm2144, %v2092, %v2143
    %vm2146 = vcmp.eq.f32.partialorder %v2092, 0.0
    %v2147 = vand.u32 %v2092, 2147483648
    %v2148 = vsel %vm2146, %v2147, %v2145
    %vm2149 = vcmask 7168
    %v2150 = vsel %vm2149, %v2099, 0.0
    %v2151 = vsel %vm2149, %v2106, 0.0
    %v2152 = vadd.f32 %v2150, %v2151
    %v2153 = vsel %vm2149, %v2113, 0.0
    %v2154 = vadd.f32 %v2152, %v2153
    %v2155 = vsel %vm2149, %v2120, 0.0
    %v2156 = vadd.f32 %v2154, %v2155
    %v2157 = vsel %vm2149, %v2127, 0.0
    %v2158 = vadd.f32 %v2156, %v2157
    %v2159 = vsel %vm2149, %v2134, 0.0
    %v2160 = vadd.f32 %v2158, %v2159
    %v2161 = vsel %vm2149, %v2141, 0.0
    %v2162 = vadd.f32 %v2160, %v2161
    %v2163 = vsel %vm2149, %v2148, 0.0
    %v2164 = vadd.f32 %v2162, %v2163
    %2165 = vadd.xlane.f32.xlu0 %v2164
    %v2166 = vpop.xlane.xlu0 %2165
    %v2167 = vrot.slane %v2166, 4
    %v2168 = vadd.f32 %v2166, %v2167
    %v2169 = vrot.slane %v2168, 2
    %v2170 = vadd.f32 %v2168, %v2169
    %v2171 = vrot.slane %v2170, 1
    %v2172 = vadd.f32 %v2170, %v2171
    %s2173 = vtos %v2172
    %v2174 = vrcp.pop 64.0
    %s2175 = vtos %v2174
    %s2176 = smul.f32 %s2173, %s2175
    %s2177 = scalar_lea.smem [#allocation2], 0
    %2178 = sst [smem:[%s2177]] %s2176
    // Predicated region
    $region14: #{seq2seq_forward.1} parent=1 // pred_check
      _
    $region15: #{seq2seq_forward.1} parent=1 // pred_check_branch
      %2180 = sbr.rel (0) target = $region17
    $region16: #{seq2seq_forward.1} parent=1 // pred_region
      _
    $region17: #{seq2seq_forward.1} parent=1 // pred_fallthru
      _
    // Predicated region
    $region18: #{seq2seq_forward.1} parent=1 // pred_check
      _
    $region19: #{seq2seq_forward.1} parent=1 // pred_check_branch
      %2182 = sbr.rel (0) target = $region21
    $region20: #{seq2seq_forward.1} parent=1 // pred_region
      %s2184 = ssub.s32 16, 16
      %2185 = vsyncadd [#allocation3], %s2184
      %2188 = dma.smem_to_hbm [#allocation2], 16, %s4, [#allocation3]
    $region21: #{seq2seq_forward.1} parent=1 // pred_fallthru
      _
    // Predicated region
    $region22: #{seq2seq_forward.1} parent=1 // pred_check
      _
    $region23: #{seq2seq_forward.1} parent=1 // pred_check_branch
      %2190 = sbr.rel (0) target = $region25
    $region24: #{seq2seq_forward.1} parent=1 // pred_region
      _
    $region25: #{seq2seq_forward.1} parent=1 // pred_fallthru
      _
    // Predicated region
    $region26: #{seq2seq_forward.1} parent=1 // pred_check
      _
    $region27: #{seq2seq_forward.1} parent=1 // pred_check_branch
      %2192 = sbr.rel (0) target = $region29
    $region28: #{seq2seq_forward.1} parent=1 // pred_region
      %2193 = dma.done [#allocation3], 16
    $region29: #{seq2seq_forward.1} parent=1 // pred_fallthru
      _
    %2194 = sfence
    %2195 = vsyncpa [#allocation3], 1

</llo_original>
